<compile_context>
chip_gen: v7x
topology: tpu7x:2x2x1
jax: 0.10.0
libtpu: 0.0.40
codegen_flags: <defaults>
</compile_context>

<pallas_src>
import functools

import numpy as np
import jax
import jax.numpy as jnp
from jax import lax
from jax.experimental import pallas as pl
from jax.experimental.pallas import tpu as pltpu


def _round_up(x, m):
    return -(-x // m) * m


def _make_policy_kernel(num_cat_cols, vocab_offsets, total_ncat,
                        log_std_min, log_std_max):
    """Kernel factory. `vocab_offsets` must be Python ints (scalars only are
    closed over, so nothing becomes a captured array constant)."""
    offsets = tuple(int(o) for o in vocab_offsets)

    def kernel(state_ref, w1e_ref, w1n_ref, whid_ref, whead_ref, bias_ref,
               out_ref):
        state = state_ref[...]                            # (C+F, TB) f32
        tb = state.shape[1]
        hidden = w1e_ref.shape[0]
        two_a = out_ref.shape[0]
        num_actions = two_a // 2

        # --- combined one-hot over the packed vocabulary, batch on lanes ----
        iota = lax.broadcasted_iota(jnp.int32, (total_ncat, tb), 0)
        hit = None
        for i in range(num_cat_cols):                     # static, tiny C
            codes = state[i:i + 1, :].astype(jnp.int32) + offsets[i]  # (1,TB)
            m = iota == codes
            hit = m if hit is None else (hit | m)
        onehot = hit.astype(jnp.float32)                  # (total_ncat, TB)
        num = state[num_cat_cols:, :]                     # (F, TB)

        b = bias_ref[...]                                 # (4H + 2A, 1) f32
        b1 = b[0 * hidden:1 * hidden]
        b2 = b[1 * hidden:2 * hidden]
        b3 = b[2 * hidden:3 * hidden]
        b4 = b[3 * hidden:4 * hidden]
        bh = b[4 * hidden:4 * hidden + two_a]

        dot_hi = functools.partial(jnp.dot, preferred_element_type=jnp.float32,
                                   precision=jax.lax.Precision.HIGHEST)
        dot_bf = functools.partial(jnp.dot, preferred_element_type=jnp.float32)

        # linear1: folded-table gather (exact under HIGHEST) + numeric half.
        x = dot_hi(w1e_ref[...], onehot) + dot_hi(w1n_ref[...], num) + b1
        x = jnp.maximum(x, 0.0)                           # (H, TB) f32

        # hidden layers 2..4: bf16 weights x bf16 activations, f32 accumulate.
        x = jnp.maximum(dot_bf(whid_ref[0], x.astype(jnp.bfloat16)) + b2, 0.0)
        x = jnp.maximum(dot_bf(whid_ref[1], x.astype(jnp.bfloat16)) + b3, 0.0)
        x = jnp.maximum(dot_bf(whid_ref[2], x.astype(jnp.bfloat16)) + b4, 0.0)

        # fused heads: rows [0, A) = mean, rows [A, 2A) = log_std (clamped).
        y = dot_bf(whead_ref[...], x.astype(jnp.bfloat16)) + bh  # (2A, TB)
        row = lax.broadcasted_iota(jnp.int32, (two_a, tb), 0)
        y = jnp.where(row >= num_actions,
                      jnp.clip(y, log_std_min, log_std_max), y)
        out_ref[...] = y.astype(out_ref.dtype)

    return kernel


def _pack_block_diag(tables):
    """Host-side: stack per-column (ncat_i, dim_i) tables block-diagonally."""
    ncats = [int(t.shape[0]) for t in tables]
    dims = [int(t.shape[1]) for t in tables]
    packed = np.zeros((sum(ncats), sum(dims)), dtype=np.float32)
    r = c = 0
    for t in tables:
        tn = np.asarray(t, dtype=np.float32)
        packed[r:r + tn.shape[0], c:c + tn.shape[1]] = tn
        r += tn.shape[0]
        c += tn.shape[1]
    offsets = tuple(int(v) for v in np.concatenate([[0], np.cumsum(ncats)[:-1]]))
    return packed, offsets, sum(ncats), sum(dims)


def policy_network_forward(state, tables, params, *,
                           log_std_min=-20.0, log_std_max=2.0,
                           block_b=1024):
    """
    state : (B, C + F) float32 -- first C columns are categorical codes.
    tables: list of (ncat_i, dim_i) float32 embedding tables.
    params: dict with w1 (total_emb+F, H), b1 (H,), w2/w3/w4 (H, H), b2/b3/b4 (H,),
            wm/ws (H, A), bm/bs (A,)  -- weights stored in (in, out) layout.
    Returns (mean, log_std), each (B, A) float32.
    """
    batch, state_dim = state.shape
    num_cat_cols = len(tables)
    packed_np, vocab_offsets, total_ncat, total_emb = _pack_block_diag(tables)
    hidden = int(params["w1"].shape[1])
    num_actions = int(params["wm"].shape[1])

    f32, bf16 = jnp.float32, jnp.bfloat16
    hi = jax.lax.Precision.HIGHEST

    # Fold the packed table into linear1's embedding half (exact one-hot row
    # selection keeps this numerically identical) and transpose everything to
    # the batch-on-lanes layout used inside the kernel.
    w1 = params["w1"].astype(f32)
    w1e_folded_t = jnp.dot(jnp.asarray(packed_np), w1[:total_emb],
                           precision=hi,
                           preferred_element_type=f32).T          # (H, total_ncat)
    w1n_t = w1[total_emb:].T.astype(f32)                          # (H, F)
    w_hidden = jnp.stack([params["w2"].T, params["w3"].T, params["w4"].T],
                         axis=0).astype(bf16)                     # (3, H, H)
    w_head = jnp.concatenate([params["wm"], params["ws"]],
                             axis=1).T.astype(bf16)               # (2A, H)
    biases = jnp.concatenate([params["b1"], params["b2"], params["b3"],
                              params["b4"], params["bm"], params["bs"]]
                             ).astype(f32).reshape(-1, 1)         # (4H+2A, 1)

    # Batch tiling: batch lives on the 128-lane axis. Use large tiles (per-tile
    # VMEM is tiny) but keep >= 2 grid steps when the batch allows, so the
    # "parallel" grid axis can shard across v7x's two TensorCores.
    lanes = 128
    b_ceil = _round_up(batch, lanes)
    tb = min(_round_up(block_b, lanes), b_ceil)
    if tb > lanes and _round_up(batch, tb) // tb < 2:
        tb = _round_up(tb // 2, lanes)
    b_pad = _round_up(batch, tb)

    state_t = state.astype(f32).T                                 # (C+F, B)
    if b_pad != batch:
        # Zero padding: code 0 is a valid row of every table, so padded
        # columns compute harmlessly and are dropped afterwards.
        state_t = jnp.pad(state_t, ((0, 0), (0, b_pad - batch)))
    grid = (b_pad // tb,)

    kernel = _make_policy_kernel(num_cat_cols, vocab_offsets, total_ncat,
                                 float(log_std_min), float(log_std_max))

    def resident(arr):
        zeros = (0,) * arr.ndim
        return pl.BlockSpec(tuple(arr.shape), lambda i: zeros)

    weight_args = (w1e_folded_t, w1n_t, w_hidden, w_head, biases)

    grid_spec = pltpu.PrefetchScalarGridSpec(
        num_scalar_prefetch=0,
        grid=grid,
        in_specs=[pl.BlockSpec((state_dim, tb), lambda i: (0, i))]
                 + [resident(a) for a in weight_args],
        out_specs=pl.BlockSpec((2 * num_actions, tb), lambda i: (0, i)),
    )

    out = pl.pallas_call(
        kernel,
        out_shape=jax.ShapeDtypeStruct((2 * num_actions, b_pad), f32),
        grid_spec=grid_spec,
        compiler_params=pltpu.CompilerParams(
            dimension_semantics=("parallel",),
            vmem_limit_bytes=32 * 1024 * 1024),
    )(state_t, *weight_args)

    mean = out[:num_actions, :batch].T
    log_std = out[num_actions:, :batch].T
    return mean, log_std


if __name__ == "__main__":
    # --- synthetic module configuration (small, consistent with the forward) ---
    cat_code_dict = {
        "col_a": list(range(10)),   # emb dim = min(50, 10 // 2) = 5
        "col_b": list(range(16)),   # emb dim = 8
        "col_c": list(range(8)),    # emb dim = 4
    }
    cat_cols = ["col_a", "col_b", "col_c"]
    num_numeric = 6
    hidden = 32
    num_actions = 2
    batch = 8
    log_std_min, log_std_max = -20.0, 2.0

    key = jax.random.PRNGKey(0)

    # Embedding tables (nn.Embedding default init ~ N(0, 1)).
    tables = []
    for col in cat_cols:
        key, sub = jax.random.split(key)
        ncat = len(cat_code_dict[col])
        dim = min(50, ncat // 2)
        tables.append(jax.random.normal(sub, (ncat, dim), dtype=jnp.float32))
    total_emb = sum(int(t.shape[1]) for t in tables)
    num_inputs = total_emb + num_numeric

    # Dense parameters, stored as (in, out) for the kernel.
    def dense(key, n_in, n_out, scale):
        k1, k2 = jax.random.split(key)
        w = jax.random.uniform(k1, (n_in, n_out), jnp.float32, -scale, scale)
        b = jax.random.uniform(k2, (n_out,), jnp.float32, -scale, scale)
        return w, b

    params = {}
    key, k = jax.random.split(key); params["w1"], params["b1"] = dense(k, num_inputs, hidden, 0.1)
    key, k = jax.random.split(key); params["w2"], params["b2"] = dense(k, hidden, hidden, 0.1)
    key, k = jax.random.split(key); params["w3"], params["b3"] = dense(k, hidden, hidden, 0.1)
    key, k = jax.random.split(key); params["w4"], params["b4"] = dense(k, hidden, hidden, 0.1)
    key, k = jax.random.split(key); params["wm"], params["bm"] = dense(k, hidden, num_actions, 0.003)
    key, k = jax.random.split(key); params["ws"], params["bs"] = dense(k, hidden, num_actions, 0.003)

    # State: first C columns are categorical codes (stored as floats, as in
    # the PyTorch module where state[:, :C].long() is taken), rest numeric.
    key, kc, kn = jax.random.split(key, 3)
    cat_idx = jnp.stack(
        [jax.random.randint(jax.random.fold_in(kc, i), (batch,), 0,
                            len(cat_code_dict[col]), dtype=jnp.int32)
         for i, col in enumerate(cat_cols)], axis=1)                  # (B, C)
    num_feat = jax.random.normal(kn, (batch, num_numeric), jnp.float32)
    state = jnp.concatenate([cat_idx.astype(jnp.float32), num_feat], axis=1)

    mean, log_std = policy_network_forward(
        state, tables, params,
        log_std_min=log_std_min, log_std_max=log_std_max)
    mean = jax.block_until_ready(mean)
    log_std = jax.block_until_ready(log_std)

    # --- pure-JAX reference mirroring the kernel's numerics:
    #     exact embedding gather + HIGHEST-precision linear1, then bf16
    #     matmuls with f32 accumulation for the hidden layers / heads
    #     (the precision relaxation recommended by the perf review). ---
    hi = jax.lax.Precision.HIGHEST

    def bf16_dot(x, w):
        return jnp.dot(x.astype(jnp.bfloat16), w.astype(jnp.bfloat16),
                       preferred_element_type=jnp.float32)

    emb_ref = jnp.concatenate(
        [tables[i][cat_idx[:, i]] for i in range(len(cat_cols))], axis=1)
    x = jnp.concatenate([emb_ref, num_feat], axis=1)
    x = jnp.maximum(jnp.dot(x, params["w1"], precision=hi,
                            preferred_element_type=jnp.float32)
                    + params["b1"], 0.0)
    x = jnp.maximum(bf16_dot(x, params["w2"]) + params["b2"], 0.0)
    x = jnp.maximum(bf16_dot(x, params["w3"]) + params["b3"], 0.0)
    x = jnp.maximum(bf16_dot(x, params["w4"]) + params["b4"], 0.0)
    mean_ref = bf16_dot(x, params["wm"]) + params["bm"]
    log_std_ref = jnp.clip(bf16_dot(x, params["ws"]) + params["bs"],
                           log_std_min, log_std_max)

    np.testing.assert_allclose(np.asarray(mean), np.asarray(mean_ref),
                               rtol=5e-4, atol=5e-5)
    np.testing.assert_allclose(np.asarray(log_std), np.asarray(log_std_ref),
                               rtol=5e-4, atol=5e-5)

    print("KERNEL_OK")
</pallas_src>

<mosaic_0001>
module attributes {stable_mosaic.version = 11 : i64} {
  func.func @kernel(%arg0: i32, %arg1: memref<9x128xf32, #tpu.memory_space<vmem>>, %arg2: memref<32x34xf32, #tpu.memory_space<vmem>>, %arg3: memref<32x6xf32, #tpu.memory_space<vmem>>, %arg4: memref<3x32x32xbf16, #tpu.memory_space<vmem>>, %arg5: memref<4x32xbf16, #tpu.memory_space<vmem>>, %arg6: memref<132x1xf32, #tpu.memory_space<vmem>>, %arg7: memref<4x128xf32, #tpu.memory_space<vmem>>) attributes {dimension_semantics = [#tpu.dimension_semantics<parallel>], iteration_bounds = array<i64: 1>, scalar_prefetch = 0 : i64, scratch_operands = 0 : i64, tpu.core_type = #tpu.core_type<tc>, window_params = [{transform_indices = @transform_0, window_bounds = array<i64: 9, 128>}, {pipeline_mode = #tpu.pipeline_mode<synchronous>, transform_indices = @transform_1, window_bounds = array<i64: 32, 34>}, {pipeline_mode = #tpu.pipeline_mode<synchronous>, transform_indices = @transform_2, window_bounds = array<i64: 32, 6>}, {pipeline_mode = #tpu.pipeline_mode<synchronous>, transform_indices = @transform_3, window_bounds = array<i64: 3, 32, 32>}, {pipeline_mode = #tpu.pipeline_mode<synchronous>, transform_indices = @transform_4, window_bounds = array<i64: 4, 32>}, {pipeline_mode = #tpu.pipeline_mode<synchronous>, transform_indices = @transform_5, window_bounds = array<i64: 132, 1>}, {transform_indices = @transform_6, window_bounds = array<i64: 4, 128>}]} {
    %c0 = arith.constant 0 : index
    %c0_0 = arith.constant 0 : index
    %0 = vector.load %arg1[%c0, %c0_0] : memref<9x128xf32, #tpu.memory_space<vmem>>, vector<9x128xf32>
    %1 = tpu.iota {dimensions = array<i32: 0>} : vector<34x128xi32>
    %2 = vector.extract_strided_slice %0 {offsets = [0, 0], sizes = [1, 128], strides = [1, 1]} : vector<9x128xf32> to vector<1x128xf32>
    %3 = arith.fptosi %2 : vector<1x128xf32> to vector<1x128xi32>
    %c0_i32 = arith.constant 0 : i32
    %4 = vector.broadcast %c0_i32 : i32 to vector<1x128xi32>
    %5 = arith.addi %3, %4 : vector<1x128xi32>
    %6 = vector.broadcast %5 : vector<1x128xi32> to vector<34x128xi32>
    %7 = arith.cmpi eq, %1, %6 : vector<34x128xi32>
    %8 = vector.extract_strided_slice %0 {offsets = [1, 0], sizes = [1, 128], strides = [1, 1]} : vector<9x128xf32> to vector<1x128xf32>
    %9 = arith.fptosi %8 : vector<1x128xf32> to vector<1x128xi32>
    %c10_i32 = arith.constant 10 : i32
    %10 = vector.broadcast %c10_i32 : i32 to vector<1x128xi32>
    %11 = arith.addi %9, %10 : vector<1x128xi32>
    %12 = vector.broadcast %11 : vector<1x128xi32> to vector<34x128xi32>
    %13 = arith.cmpi eq, %1, %12 : vector<34x128xi32>
    %14 = arith.ori %7, %13 : vector<34x128xi1>
    %15 = vector.extract_strided_slice %0 {offsets = [2, 0], sizes = [1, 128], strides = [1, 1]} : vector<9x128xf32> to vector<1x128xf32>
    %16 = arith.fptosi %15 : vector<1x128xf32> to vector<1x128xi32>
    %c26_i32 = arith.constant 26 : i32
    %17 = vector.broadcast %c26_i32 : i32 to vector<1x128xi32>
    %18 = arith.addi %16, %17 : vector<1x128xi32>
    %19 = vector.broadcast %18 : vector<1x128xi32> to vector<34x128xi32>
    %20 = arith.cmpi eq, %1, %19 : vector<34x128xi32>
    %21 = arith.ori %14, %20 : vector<34x128xi1>
    %22 = arith.extui %21 : vector<34x128xi1> to vector<34x128xi32>
    %23 = arith.sitofp %22 : vector<34x128xi32> to vector<34x128xf32>
    %24 = vector.extract_strided_slice %0 {offsets = [3, 0], sizes = [6, 128], strides = [1, 1]} : vector<9x128xf32> to vector<6x128xf32>
    %c0_1 = arith.constant 0 : index
    %c0_2 = arith.constant 0 : index
    %25 = vector.load %arg6[%c0_1, %c0_2] : memref<132x1xf32, #tpu.memory_space<vmem>>, vector<132x1xf32>
    %26 = vector.extract_strided_slice %25 {offsets = [0, 0], sizes = [32, 1], strides = [1, 1]} : vector<132x1xf32> to vector<32x1xf32>
    %27 = vector.extract_strided_slice %25 {offsets = [32, 0], sizes = [32, 1], strides = [1, 1]} : vector<132x1xf32> to vector<32x1xf32>
    %28 = vector.extract_strided_slice %25 {offsets = [64, 0], sizes = [32, 1], strides = [1, 1]} : vector<132x1xf32> to vector<32x1xf32>
    %29 = vector.extract_strided_slice %25 {offsets = [96, 0], sizes = [32, 1], strides = [1, 1]} : vector<132x1xf32> to vector<32x1xf32>
    %30 = vector.extract_strided_slice %25 {offsets = [128, 0], sizes = [4, 1], strides = [1, 1]} : vector<132x1xf32> to vector<4x1xf32>
    %c0_3 = arith.constant 0 : index
    %c0_4 = arith.constant 0 : index
    %31 = vector.load %arg2[%c0_3, %c0_4] : memref<32x34xf32, #tpu.memory_space<vmem>>, vector<32x34xf32>
    %cst = arith.constant dense<0.000000e+00> : vector<32x128xf32>
    %32 = tpu.matmul %31, %23, %cst {dimension_numbers = #tpu.dot_dimension_numbers<[1], [0], [0], [1], [0, 0, 1, 1], [], []>, precision = #tpu.contract_precision<fp32>} : vector<32x34xf32>, vector<34x128xf32>, vector<32x128xf32> -> vector<32x128xf32>
    %c0_5 = arith.constant 0 : index
    %c0_6 = arith.constant 0 : index
    %33 = vector.load %arg3[%c0_5, %c0_6] : memref<32x6xf32, #tpu.memory_space<vmem>>, vector<32x6xf32>
    %cst_7 = arith.constant dense<0.000000e+00> : vector<32x128xf32>
    %34 = tpu.matmul %33, %24, %cst_7 {dimension_numbers = #tpu.dot_dimension_numbers<[1], [0], [0], [1], [0, 0, 1, 1], [], []>, precision = #tpu.contract_precision<fp32>} : vector<32x6xf32>, vector<6x128xf32>, vector<32x128xf32> -> vector<32x128xf32>
    %35 = arith.addf %32, %34 : vector<32x128xf32>
    %36 = vector.broadcast %26 : vector<32x1xf32> to vector<32x128xf32>
    %37 = arith.addf %35, %36 : vector<32x128xf32>
    %cst_8 = arith.constant 0.000000e+00 : f32
    %38 = vector.broadcast %cst_8 : f32 to vector<32x128xf32>
    %39 = arith.maximumf %37, %38 : vector<32x128xf32>
    %c0_9 = arith.constant 0 : index
    %c0_10 = arith.constant 0 : index
    %c0_11 = arith.constant 0 : index
    %40 = vector.load %arg4[%c0_9, %c0_10, %c0_11] : memref<3x32x32xbf16, #tpu.memory_space<vmem>>, vector<1x32x32xbf16>
    %41 = vector.shape_cast %40 : vector<1x32x32xbf16> to vector<32x32xbf16>
    %42 = arith.truncf %39 : vector<32x128xf32> to vector<32x128xbf16>
    %cst_12 = arith.constant dense<0.000000e+00> : vector<32x128xf32>
    %43 = tpu.matmul %41, %42, %cst_12 {dimension_numbers = #tpu.dot_dimension_numbers<[1], [0], [0], [1], [0, 0, 1, 1], [], []>} : vector<32x32xbf16>, vector<32x128xbf16>, vector<32x128xf32> -> vector<32x128xf32>
    %44 = vector.broadcast %27 : vector<32x1xf32> to vector<32x128xf32>
    %45 = arith.addf %43, %44 : vector<32x128xf32>
    %cst_13 = arith.constant 0.000000e+00 : f32
    %46 = vector.broadcast %cst_13 : f32 to vector<32x128xf32>
    %47 = arith.maximumf %45, %46 : vector<32x128xf32>
    %c1 = arith.constant 1 : index
    %c0_14 = arith.constant 0 : index
    %c0_15 = arith.constant 0 : index
    %48 = vector.load %arg4[%c1, %c0_14, %c0_15] : memref<3x32x32xbf16, #tpu.memory_space<vmem>>, vector<1x32x32xbf16>
    %49 = vector.shape_cast %48 : vector<1x32x32xbf16> to vector<32x32xbf16>
    %50 = arith.truncf %47 : vector<32x128xf32> to vector<32x128xbf16>
    %cst_16 = arith.constant dense<0.000000e+00> : vector<32x128xf32>
    %51 = tpu.matmul %49, %50, %cst_16 {dimension_numbers = #tpu.dot_dimension_numbers<[1], [0], [0], [1], [0, 0, 1, 1], [], []>} : vector<32x32xbf16>, vector<32x128xbf16>, vector<32x128xf32> -> vector<32x128xf32>
    %52 = vector.broadcast %28 : vector<32x1xf32> to vector<32x128xf32>
    %53 = arith.addf %51, %52 : vector<32x128xf32>
    %cst_17 = arith.constant 0.000000e+00 : f32
    %54 = vector.broadcast %cst_17 : f32 to vector<32x128xf32>
    %55 = arith.maximumf %53, %54 : vector<32x128xf32>
    %c2 = arith.constant 2 : index
    %c0_18 = arith.constant 0 : index
    %c0_19 = arith.constant 0 : index
    %56 = vector.load %arg4[%c2, %c0_18, %c0_19] : memref<3x32x32xbf16, #tpu.memory_space<vmem>>, vector<1x32x32xbf16>
    %57 = vector.shape_cast %56 : vector<1x32x32xbf16> to vector<32x32xbf16>
    %58 = arith.truncf %55 : vector<32x128xf32> to vector<32x128xbf16>
    %cst_20 = arith.constant dense<0.000000e+00> : vector<32x128xf32>
    %59 = tpu.matmul %57, %58, %cst_20 {dimension_numbers = #tpu.dot_dimension_numbers<[1], [0], [0], [1], [0, 0, 1, 1], [], []>} : vector<32x32xbf16>, vector<32x128xbf16>, vector<32x128xf32> -> vector<32x128xf32>
    %60 = vector.broadcast %29 : vector<32x1xf32> to vector<32x128xf32>
    %61 = arith.addf %59, %60 : vector<32x128xf32>
    %cst_21 = arith.constant 0.000000e+00 : f32
    %62 = vector.broadcast %cst_21 : f32 to vector<32x128xf32>
    %63 = arith.maximumf %61, %62 : vector<32x128xf32>
    %c0_22 = arith.constant 0 : index
    %c0_23 = arith.constant 0 : index
    %64 = vector.load %arg5[%c0_22, %c0_23] : memref<4x32xbf16, #tpu.memory_space<vmem>>, vector<4x32xbf16>
    %65 = arith.truncf %63 : vector<32x128xf32> to vector<32x128xbf16>
    %cst_24 = arith.constant dense<0.000000e+00> : vector<4x128xf32>
    %66 = tpu.matmul %64, %65, %cst_24 {dimension_numbers = #tpu.dot_dimension_numbers<[1], [0], [0], [1], [0, 0, 1, 1], [], []>} : vector<4x32xbf16>, vector<32x128xbf16>, vector<4x128xf32> -> vector<4x128xf32>
    %67 = vector.broadcast %30 : vector<4x1xf32> to vector<4x128xf32>
    %68 = arith.addf %66, %67 : vector<4x128xf32>
    %69 = tpu.iota {dimensions = array<i32: 0>} : vector<4x128xi32>
    %c2_i32 = arith.constant 2 : i32
    %70 = vector.broadcast %c2_i32 : i32 to vector<4x128xi32>
    %71 = arith.cmpi sge, %69, %70 : vector<4x128xi32>
    %cst_25 = arith.constant -2.000000e+01 : f32
    %cst_26 = arith.constant 2.000000e+00 : f32
    %72 = vector.broadcast %cst_25 : f32 to vector<4x128xf32>
    %73 = arith.maximumf %72, %68 : vector<4x128xf32>
    %74 = vector.broadcast %cst_26 : f32 to vector<4x128xf32>
    %75 = arith.minimumf %74, %73 : vector<4x128xf32>
    %76 = arith.select %71, %75, %68 : vector<4x128xi1>, vector<4x128xf32>
    %c0_27 = arith.constant 0 : index
    %c0_28 = arith.constant 0 : index
    %77 = vector.load %arg7[%c0_27, %c0_28] : memref<4x128xf32, #tpu.memory_space<vmem>>, vector<4x128xf32>
    tpu.vector_store %arg7[%c0_27, %c0_28], %76 {strides = array<i32>} : memref<4x128xf32, #tpu.memory_space<vmem>>, vector<4x128xf32>,
    return
  }
  func.func @transform_0(%arg0: i32) -> (i32, i32) {
    %c0_i32 = arith.constant 0 : i32
    %c0_i32_0 = arith.constant 0 : i32
    return %c0_i32, %arg0 : i32, i32
  }
  func.func @transform_1(%arg0: i32) -> (i32, i32) {
    %c0_i32 = arith.constant 0 : i32
    %c0_i32_0 = arith.constant 0 : i32
    %c0_i32_1 = arith.constant 0 : i32
    return %c0_i32, %c0_i32_0 : i32, i32
  }
  func.func @transform_2(%arg0: i32) -> (i32, i32) {
    %c0_i32 = arith.constant 0 : i32
    %c0_i32_0 = arith.constant 0 : i32
    %c0_i32_1 = arith.constant 0 : i32
    return %c0_i32, %c0_i32_0 : i32, i32
  }
  func.func @transform_3(%arg0: i32) -> (i32, i32, i32) {
    %c0_i32 = arith.constant 0 : i32
    %c0_i32_0 = arith.constant 0 : i32
    %c0_i32_1 = arith.constant 0 : i32
    %c0_i32_2 = arith.constant 0 : i32
    return %c0_i32, %c0_i32_0, %c0_i32_1 : i32, i32, i32
  }
  func.func @transform_4(%arg0: i32) -> (i32, i32) {
    %c0_i32 = arith.constant 0 : i32
    %c0_i32_0 = arith.constant 0 : i32
    %c0_i32_1 = arith.constant 0 : i32
    return %c0_i32, %c0_i32_0 : i32, i32
  }
  func.func @transform_5(%arg0: i32) -> (i32, i32) {
    %c0_i32 = arith.constant 0 : i32
    %c0_i32_0 = arith.constant 0 : i32
    %c0_i32_1 = arith.constant 0 : i32
    return %c0_i32, %c0_i32_0 : i32, i32
  }
  func.func @transform_6(%arg0: i32) -> (i32, i32) {
    %c0_i32 = arith.constant 0 : i32
    %c0_i32_0 = arith.constant 0 : i32
    return %c0_i32, %arg0 : i32, i32
  }
}

</mosaic_0001>

<llo_original>
// kernel: tpu_custom_call.1
$region0: #{tpu_custom_call.1}
  #allocation0 [shape = 'u32[]', space=smem, size = 0x4, offset = 0x4, fixed_abs, tag = 'smem constant byte address 0x4 - core index']
  #allocation1 [shape = 'u32[144,128]{1,0:T(1,128)}', space=vmem, size = 0x12000, scoped, tag = 'internal scratch']
  %s0 = inlined_call_operand.vmem [shape: f32[9,128], index: 0, kind: input, shape index: {}]
  %s1 = inlined_call_operand.vmem [shape: f32[32,34], index: 1, kind: input, shape index: {}]
  %s2 = inlined_call_operand.vmem [shape: f32[32,6], index: 2, kind: input, shape index: {}]
  %s3 = inlined_call_operand.vmem [shape: bf16[3,32,32], index: 3, kind: input, shape index: {}]
  %s4 = inlined_call_operand.vmem [shape: bf16[4,32], index: 4, kind: input, shape index: {}]
  %s5 = inlined_call_operand.vmem [shape: f32[132,1], index: 5, kind: input, shape index: {}]
  %s6 = inlined_call_operand.hbm [shape: f32[4,128], index: 6, kind: output, shape index: {}]
  %s7 = sld [smem:[#allocation0]]
  $region34: #{tpu_custom_call.1} parent=0
    _
  %s9 = ssub.s32 1, %s7
  %s10 = scalar_select 0, %s9, %s7
  $region1: #{tpu_custom_call.1} parent=0
    #allocation2 [shape = 'u8[2048]{0}', space=vmem, size = 0x800, scoped, tag = 'output window, operand 0, single buffered']
    #allocation3 [shape = 's32[1]{0}', space=sflag, size = 0x4, scoped, tag = 'scoped memory for tpu_custom_call.1']
    %11 = vsyncpa [#allocation3], 0
    // Predicated region
    $region2: #{tpu_custom_call.1} parent=1 // pred_check
      _
    $region3: #{tpu_custom_call.1} parent=1 // pred_check_branch
      %13 = sbr.rel (0) target = $region5
    $region4: #{tpu_custom_call.1} parent=1 // pred_region
      _
    $region5: #{tpu_custom_call.1} parent=1 // pred_fallthru
      _
    // Predicated region
    $region6: #{tpu_custom_call.1} parent=1 // pred_check
      _
    $region7: #{tpu_custom_call.1} parent=1 // pred_check_branch
      %15 = sbr.rel (0) target = $region9
    $region8: #{tpu_custom_call.1} parent=1 // pred_region
      _
    $region9: #{tpu_custom_call.1} parent=1 // pred_fallthru
      _
    // Predicated region
    $region10: #{tpu_custom_call.1} parent=1 // pred_check
      _
    $region11: #{tpu_custom_call.1} parent=1 // pred_check_branch
      %17 = sbr.rel (0) target = $region13
    $region12: #{tpu_custom_call.1} parent=1 // pred_region
      _
    $region13: #{tpu_custom_call.1} parent=1 // pred_fallthru
      _
    // Predicated region
    $region14: #{tpu_custom_call.1} parent=1 // pred_check
      _
    $region15: #{tpu_custom_call.1} parent=1 // pred_check_branch
      %19 = sbr.rel (0) target = $region17
    $region16: #{tpu_custom_call.1} parent=1 // pred_region
      _
    $region17: #{tpu_custom_call.1} parent=1 // pred_fallthru
      _
    // Predicated region
    $region18: #{tpu_custom_call.1} parent=1 // pred_check
      _
    $region19: #{tpu_custom_call.1} parent=1 // pred_check_branch
      %21 = sbr.rel (0) target = $region21
    $region20: #{tpu_custom_call.1} parent=1 // pred_region
      _
    $region21: #{tpu_custom_call.1} parent=1 // pred_fallthru
      _
    // Predicated region
    $region22: #{tpu_custom_call.1} parent=1 // pred_check
      _
    $region23: #{tpu_custom_call.1} parent=1 // pred_check_branch
      %23 = sbr.rel (0) target = $region25
    $region24: #{tpu_custom_call.1} parent=1 // pred_region
      _
    $region25: #{tpu_custom_call.1} parent=1 // pred_fallthru
      _
    %v25 = vld [vmem:[%s0] sm:$0xff]
    %v26 = vld [vmem:[%s0 + $0x8] sm:$0x1]
    %v27 = vlaneseq
    %v28 = vshrl.u32 %v27, 7
    %v29 = vadd.s32 %v28, 8
    %v30 = vadd.s32 %v28, 16
    %v31 = vadd.s32 %v28, 24
    %v32 = vadd.s32 %v28, 32
    %v33 = vcvt.f32.s32.to.zero.pseudo %v25
    %v34 = vlaneseq
    %v35 = vshrl.u32 %v34, 7
    %v36 = vsub.s32 0, %v35
    %v37 = vrot.slane %v33, %v36
    %vm38 = vcmp.eq.s32.totalorder %v28, %v37
    %vm39 = vcmp.eq.s32.totalorder %v29, %v37
    %vm40 = vcmp.eq.s32.totalorder %v30, %v37
    %vm41 = vcmp.eq.s32.totalorder %v31, %v37
    %vm42 = vcmp.eq.s32.totalorder %v32, %v37
    %v43 = vadd.s32 %v33, 10
    %v44 = vlaneseq
    %v45 = vshrl.u32 %v44, 7
    %v46 = vsub.s32 1, %v45
    %v47 = vrot.slane %v43, %v46
    %vm48 = vcmp.eq.s32.totalorder %v28, %v47
    %vm49 = vcmp.eq.s32.totalorder %v29, %v47
    %vm50 = vcmp.eq.s32.totalorder %v30, %v47
    %vm51 = vcmp.eq.s32.totalorder %v31, %v47
    %vm52 = vcmp.eq.s32.totalorder %v32, %v47
    %vm53 = vmor %vm38, %vm48
    %vm54 = vmor %vm39, %vm49
    %vm55 = vmor %vm40, %vm50
    %vm56 = vmor %vm41, %vm51
    %vm57 = vmor %vm42, %vm52
    %v58 = vadd.s32 %v33, 26
    %v59 = vlaneseq
    %v60 = vshrl.u32 %v59, 7
    %v61 = vsub.s32 2, %v60
    %v62 = vrot.slane %v58, %v61
    %vm63 = vcmp.eq.s32.totalorder %v28, %v62
    %vm64 = vcmp.eq.s32.totalorder %v29, %v62
    %vm65 = vcmp.eq.s32.totalorder %v30, %v62
    %vm66 = vcmp.eq.s32.totalorder %v31, %v62
    %vm67 = vcmp.eq.s32.totalorder %v32, %v62
    %vm68 = vmor %vm53, %vm63
    %vm69 = vmor %vm54, %vm64
    %vm70 = vmor %vm55, %vm65
    %vm71 = vmor %vm56, %vm66
    %vm72 = vmor %vm57, %vm67
    %v73 = vsel %vm68, 1, 0
    %v74 = vsel %vm69, 1, 0
    %v75 = vsel %vm70, 1, 0
    %v76 = vsel %vm71, 1, 0
    %v77 = vsel %vm72, 1, 0
    %v78 = vcvt.s32.f32 %v73
    %v79 = vcvt.s32.f32 %v74
    %v80 = vcvt.s32.f32 %v75
    %v81 = vcvt.s32.f32 %v76
    %v82 = vcvt.s32.f32 %v77
    %v83 = vld [vmem:[%s5] sm:$0xff]
    %v84 = vld [vmem:[%s5 + $0x8] sm:$0xff]
    %v85 = vld [vmem:[%s5 + $0x10] sm:$0xff]
    %v86 = vld [vmem:[%s5 + $0x18] sm:$0xff]
    %v87 = vld [vmem:[%s5 + $0x20] sm:$0xff]
    %v88 = vld [vmem:[%s5 + $0x28] sm:$0xff]
    %v89 = vld [vmem:[%s5 + $0x30] sm:$0xff]
    %v90 = vld [vmem:[%s5 + $0x38] sm:$0xff]
    %v91 = vld [vmem:[%s5 + $0x40] sm:$0xff]
    %v92 = vld [vmem:[%s5 + $0x48] sm:$0xff]
    %v93 = vld [vmem:[%s5 + $0x50] sm:$0xff]
    %v94 = vld [vmem:[%s5 + $0x58] sm:$0xff]
    %v95 = vld [vmem:[%s5 + $0x60] sm:$0xff]
    %v96 = vld [vmem:[%s5 + $0x68] sm:$0xff]
    %v97 = vld [vmem:[%s5 + $0x70] sm:$0xff]
    %v98 = vld [vmem:[%s5 + $0x78] sm:$0xff]
    %v99 = vld [vmem:[%s5 + $0x80] sm:$0xf]
    %v100 = vld [vmem:[%s1] sm:$0xff]
    %v101 = vld [vmem:[%s1 + $0x8] sm:$0xff]
    %v102 = vld [vmem:[%s1 + $0x10] sm:$0xff]
    %v103 = vld [vmem:[%s1 + $0x18] sm:$0xff]
    %v104 = vld [vmem:[%s2] sm:$0xff]
    %v105 = vld [vmem:[%s2 + $0x8] sm:$0xff]
    %v106 = vld [vmem:[%s2 + $0x10] sm:$0xff]
    %v107 = vld [vmem:[%s2 + $0x18] sm:$0xff]
    %vm110 = vcmask 1044480
    %v111 = vrot.slane %v25, 3
    %v112 = vrot.slane %v26, 3
    %v113 = vsel %vm110, %v111, %v112
    %vm114 = vcmask 48128
    %v116 = vsel %vm114, %v104, 0
    %v119 = vsel %vm114, %v105, 0
    %v122 = vsel %vm114, %v106, 0
    %v125 = vsel %vm114, %v107, 0
    %vm127 = vcmask 1045504
    %v128 = vsel %vm127, %v113, 0
    %130 = vmatprep.subr.mxu0 0.0
    %v131 = vand.u32 %v128, 4294901760
    %132 = vmatpush1.msra.mxu0 %v131
    %133 = vmatprep.subr.mxu0 0.0
    %134 = vmatpush1.msra.mxu0 0.0
    %135 = vmatprep.subr.mxu0 0.0
    %136 = vmatpush1.msra.mxu0 0.0
    %137 = vmatprep.subr.mxu0 0.0
    %138 = vmatpush1.msra.mxu0 0.0
    %139 = vmatprep.subr.mxu0 0.0
    %140 = vmatpush1.msra.mxu0 0.0
    %141 = vmatprep.subr.mxu0 0.0
    %142 = vmatpush1.msra.mxu0 0.0
    %143 = vmatprep.subr.mxu0 0.0
    %144 = vmatpush1.msra.mxu0 0.0
    %145 = vmatprep.subr.mxu0 0.0
    %146 = vmatpush1.msra.mxu0 0.0
    %147 = vmatprep.subr.mxu0 0.0
    %148 = vmatpush1.msra.mxu0 0.0
    %149 = vmatprep.subr.mxu0 0.0
    %150 = vmatpush1.msra.mxu0 0.0
    %151 = vmatprep.subr.mxu0 0.0
    %152 = vmatpush1.msra.mxu0 0.0
    %153 = vmatprep.subr.mxu0 0.0
    %154 = vmatpush1.msra.mxu0 0.0
    %155 = vmatprep.subr.mxu0 0.0
    %156 = vmatpush1.msra.mxu0 0.0
    %157 = vmatprep.subr.mxu0 0.0
    %158 = vmatpush1.msra.mxu0 0.0
    %159 = vmatprep.subr.mxu0 0.0
    %160 = vmatpush1.msra.mxu0 0.0
    %161 = vmatprep.subr.mxu0 0.0
    %162 = vmatpush1.msra.mxu0 0.0
    %163 = vmatprep.subr.mxu0 0.0
    %164 = vmatpush1.msra.mxu0 0.0
    %165 = vmatprep.subr.mxu0 0.0
    %166 = vmatpush1.msra.mxu0 0.0
    %167 = vmatprep.subr.mxu0 0.0
    %168 = vmatpush1.msra.mxu0 0.0
    %169 = vmatprep.subr.mxu0 0.0
    %170 = vmatpush1.msra.mxu0 0.0
    %171 = vmatprep.subr.mxu0 0.0
    %172 = vmatpush1.msra.mxu0 0.0
    %173 = vmatprep.subr.mxu0 0.0
    %174 = vmatpush1.msra.mxu0 0.0
    %175 = vmatprep.subr.mxu0 0.0
    %176 = vmatpush1.msra.mxu0 0.0
    %177 = vmatprep.subr.mxu0 0.0
    %178 = vmatpush1.msra.mxu0 0.0
    %179 = vmatprep.subr.mxu0 0.0
    %180 = vmatpush1.msra.mxu0 0.0
    %181 = vmatprep.subr.mxu0 0.0
    %182 = vmatpush1.msra.mxu0 0.0
    %183 = vmatprep.subr.mxu0 0.0
    %184 = vmatpush1.msra.mxu0 0.0
    %185 = vmatprep.subr.mxu0 0.0
    %186 = vmatpush1.msra.mxu0 0.0
    %187 = vmatprep.subr.mxu0 0.0
    %188 = vmatpush1.msra.mxu0 0.0
    %189 = vmatprep.subr.mxu0 0.0
    %190 = vmatpush1.msra.mxu0 0.0
    %191 = vmatprep.subr.mxu0 0.0
    %192 = vmatpush1.msra.mxu0 0.0
    %193 = vmatprep.subr.mxu0 0.0
    %194 = vmatpush1.msra.mxu0 0.0
    %195 = vmatprep.mubr.f32.mxu0 0.0
    %v196 = vand.u32 %v116, 4294901760
    %v197 = vsub.f32 %v116, %v196
    %v198 = vand.u32 %v197, 4294901760
    %v199 = vsub.f32 %v197, %v198
    %v200 = vand.u32 %v199, 4294901760
    %201 = vmatmul.mubr.f32.gmra.mrb[0].mxu0 %v200
    %v202 = vpop.f32.mrb[0].mxu0
    %v203 = vadd.f32 0.0, %v202
    %v204 = vpop.f32.mrb[0].mxu0
    %205 = vmatprep.mubr.f32.mxu0 0.0
    %v206 = vand.u32 %v119, 4294901760
    %v207 = vsub.f32 %v119, %v206
    %v208 = vand.u32 %v207, 4294901760
    %v209 = vsub.f32 %v207, %v208
    %v210 = vand.u32 %v209, 4294901760
    %211 = vmatmul.mubr.f32.gmra.mrb[0].mxu0 %v210
    %v212 = vpop.f32.mrb[0].mxu0
    %v213 = vadd.f32 0.0, %v212
    %v214 = vpop.f32.mrb[0].mxu0
    %215 = vmatprep.mubr.f32.mxu0 0.0
    %v216 = vand.u32 %v122, 4294901760
    %v217 = vsub.f32 %v122, %v216
    %v218 = vand.u32 %v217, 4294901760
    %v219 = vsub.f32 %v217, %v218
    %v220 = vand.u32 %v219, 4294901760
    %221 = vmatmul.mubr.f32.gmra.mrb[0].mxu0 %v220
    %v222 = vpop.f32.mrb[0].mxu0
    %v223 = vadd.f32 0.0, %v222
    %v224 = vpop.f32.mrb[0].mxu0
    %225 = vmatprep.mubr.f32.mxu0 0.0
    %v226 = vand.u32 %v125, 4294901760
    %v227 = vsub.f32 %v125, %v226
    %v228 = vand.u32 %v227, 4294901760
    %v229 = vsub.f32 %v227, %v228
    %v230 = vand.u32 %v229, 4294901760
    %231 = vmatmul.mubr.f32.gmra.mrb[0].mxu0 %v230
    %v232 = vpop.f32.mrb[0].mxu0
    %v233 = vadd.f32 0.0, %v232
    %v234 = vpop.f32.mrb[0].mxu0
    %235 = vdwg.mxu0
    %236 = vmatprep.subr.mxu0 0.0
    %v237 = vand.u32 %v128, 4294901760
    %v238 = vsub.f32 %v128, %v237
    %v239 = vand.u32 %v238, 4294901760
    %v240 = vsub.f32 %v238, %v239
    %v241 = vand.u32 %v240, 4294901760
    %242 = vmatpush1.msra.mxu0 %v241
    %243 = vmatprep.subr.mxu0 0.0
    %244 = vmatpush1.msra.mxu0 0.0
    %245 = vmatprep.subr.mxu0 0.0
    %246 = vmatpush1.msra.mxu0 0.0
    %247 = vmatprep.subr.mxu0 0.0
    %248 = vmatpush1.msra.mxu0 0.0
    %249 = vmatprep.subr.mxu0 0.0
    %250 = vmatpush1.msra.mxu0 0.0
    %251 = vmatprep.subr.mxu0 0.0
    %252 = vmatpush1.msra.mxu0 0.0
    %253 = vmatprep.subr.mxu0 0.0
    %254 = vmatpush1.msra.mxu0 0.0
    %255 = vmatprep.subr.mxu0 0.0
    %256 = vmatpush1.msra.mxu0 0.0
    %257 = vmatprep.subr.mxu0 0.0
    %258 = vmatpush1.msra.mxu0 0.0
    %259 = vmatprep.subr.mxu0 0.0
    %260 = vmatpush1.msra.mxu0 0.0
    %261 = vmatprep.subr.mxu0 0.0
    %262 = vmatpush1.msra.mxu0 0.0
    %263 = vmatprep.subr.mxu0 0.0
    %264 = vmatpush1.msra.mxu0 0.0
    %265 = vmatprep.subr.mxu0 0.0
    %266 = vmatpush1.msra.mxu0 0.0
    %267 = vmatprep.subr.mxu0 0.0
    %268 = vmatpush1.msra.mxu0 0.0
    %269 = vmatprep.subr.mxu0 0.0
    %270 = vmatpush1.msra.mxu0 0.0
    %271 = vmatprep.subr.mxu0 0.0
    %272 = vmatpush1.msra.mxu0 0.0
    %273 = vmatprep.subr.mxu0 0.0
    %274 = vmatpush1.msra.mxu0 0.0
    %275 = vmatprep.subr.mxu0 0.0
    %276 = vmatpush1.msra.mxu0 0.0
    %277 = vmatprep.subr.mxu0 0.0
    %278 = vmatpush1.msra.mxu0 0.0
    %279 = vmatprep.subr.mxu0 0.0
    %280 = vmatpush1.msra.mxu0 0.0
    %281 = vmatprep.subr.mxu0 0.0
    %282 = vmatpush1.msra.mxu0 0.0
    %283 = vmatprep.subr.mxu0 0.0
    %284 = vmatpush1.msra.mxu0 0.0
    %285 = vmatprep.subr.mxu0 0.0
    %286 = vmatpush1.msra.mxu0 0.0
    %287 = vmatprep.subr.mxu0 0.0
    %288 = vmatpush1.msra.mxu0 0.0
    %289 = vmatprep.subr.mxu0 0.0
    %290 = vmatpush1.msra.mxu0 0.0
    %291 = vmatprep.subr.mxu0 0.0
    %292 = vmatpush1.msra.mxu0 0.0
    %293 = vmatprep.subr.mxu0 0.0
    %294 = vmatpush1.msra.mxu0 0.0
    %295 = vmatprep.subr.mxu0 0.0
    %296 = vmatpush1.msra.mxu0 0.0
    %297 = vmatprep.subr.mxu0 0.0
    %298 = vmatpush1.msra.mxu0 0.0
    %299 = vmatprep.subr.mxu0 0.0
    %300 = vmatpush1.msra.mxu0 0.0
    %301 = vmatprep.subr.mxu0 0.0
    %302 = vmatpush1.msra.mxu0 0.0
    %303 = vmatprep.subr.mxu0 0.0
    %304 = vmatpush1.msra.mxu0 0.0
    %305 = vmatprep.mubr.f32.mxu0 0.0
    %v306 = vand.u32 %v116, 4294901760
    %307 = vmatmul.mubr.f32.gmra.mrb[0].mxu0 %v306
    %v308 = vpop.f32.mrb[0].mxu0
    %v309 = vadd.f32 %v203, %v308
    %v310 = vpop.f32.mrb[0].mxu0
    %311 = vmatprep.mubr.f32.mxu0 0.0
    %v312 = vand.u32 %v119, 4294901760
    %313 = vmatmul.mubr.f32.gmra.mrb[0].mxu0 %v312
    %v314 = vpop.f32.mrb[0].mxu0
    %v315 = vadd.f32 %v213, %v314
    %v316 = vpop.f32.mrb[0].mxu0
    %317 = vmatprep.mubr.f32.mxu0 0.0
    %v318 = vand.u32 %v122, 4294901760
    %319 = vmatmul.mubr.f32.gmra.mrb[0].mxu0 %v318
    %v320 = vpop.f32.mrb[0].mxu0
    %v321 = vadd.f32 %v223, %v320
    %v322 = vpop.f32.mrb[0].mxu0
    %323 = vmatprep.mubr.f32.mxu0 0.0
    %v324 = vand.u32 %v125, 4294901760
    %325 = vmatmul.mubr.f32.gmra.mrb[0].mxu0 %v324
    %v326 = vpop.f32.mrb[0].mxu0
    %v327 = vadd.f32 %v233, %v326
    %v328 = vpop.f32.mrb[0].mxu0
    %329 = vdwg.mxu0
    %330 = vmatprep.subr.mxu0 0.0
    %v331 = vand.u32 %v128, 4294901760
    %v332 = vsub.f32 %v128, %v331
    %333 = vmatpush1.msra.mxu0 %v332
    %334 = vmatprep.subr.mxu0 0.0
    %335 = vmatpush1.msra.mxu0 0.0
    %336 = vmatprep.subr.mxu0 0.0
    %337 = vmatpush1.msra.mxu0 0.0
    %338 = vmatprep.subr.mxu0 0.0
    %339 = vmatpush1.msra.mxu0 0.0
    %340 = vmatprep.subr.mxu0 0.0
    %341 = vmatpush1.msra.mxu0 0.0
    %342 = vmatprep.subr.mxu0 0.0
    %343 = vmatpush1.msra.mxu0 0.0
    %344 = vmatprep.subr.mxu0 0.0
    %345 = vmatpush1.msra.mxu0 0.0
    %346 = vmatprep.subr.mxu0 0.0
    %347 = vmatpush1.msra.mxu0 0.0
    %348 = vmatprep.subr.mxu0 0.0
    %349 = vmatpush1.msra.mxu0 0.0
    %350 = vmatprep.subr.mxu0 0.0
    %351 = vmatpush1.msra.mxu0 0.0
    %352 = vmatprep.subr.mxu0 0.0
    %353 = vmatpush1.msra.mxu0 0.0
    %354 = vmatprep.subr.mxu0 0.0
    %355 = vmatpush1.msra.mxu0 0.0
    %356 = vmatprep.subr.mxu0 0.0
    %357 = vmatpush1.msra.mxu0 0.0
    %358 = vmatprep.subr.mxu0 0.0
    %359 = vmatpush1.msra.mxu0 0.0
    %360 = vmatprep.subr.mxu0 0.0
    %361 = vmatpush1.msra.mxu0 0.0
    %362 = vmatprep.subr.mxu0 0.0
    %363 = vmatpush1.msra.mxu0 0.0
    %364 = vmatprep.subr.mxu0 0.0
    %365 = vmatpush1.msra.mxu0 0.0
    %366 = vmatprep.subr.mxu0 0.0
    %367 = vmatpush1.msra.mxu0 0.0
    %368 = vmatprep.subr.mxu0 0.0
    %369 = vmatpush1.msra.mxu0 0.0
    %370 = vmatprep.subr.mxu0 0.0
    %371 = vmatpush1.msra.mxu0 0.0
    %372 = vmatprep.subr.mxu0 0.0
    %373 = vmatpush1.msra.mxu0 0.0
    %374 = vmatprep.subr.mxu0 0.0
    %375 = vmatpush1.msra.mxu0 0.0
    %376 = vmatprep.subr.mxu0 0.0
    %377 = vmatpush1.msra.mxu0 0.0
    %378 = vmatprep.subr.mxu0 0.0
    %379 = vmatpush1.msra.mxu0 0.0
    %380 = vmatprep.subr.mxu0 0.0
    %381 = vmatpush1.msra.mxu0 0.0
    %382 = vmatprep.subr.mxu0 0.0
    %383 = vmatpush1.msra.mxu0 0.0
    %384 = vmatprep.subr.mxu0 0.0
    %385 = vmatpush1.msra.mxu0 0.0
    %386 = vmatprep.subr.mxu0 0.0
    %387 = vmatpush1.msra.mxu0 0.0
    %388 = vmatprep.subr.mxu0 0.0
    %389 = vmatpush1.msra.mxu0 0.0
    %390 = vmatprep.subr.mxu0 0.0
    %391 = vmatpush1.msra.mxu0 0.0
    %392 = vmatprep.subr.mxu0 0.0
    %393 = vmatpush1.msra.mxu0 0.0
    %394 = vmatprep.subr.mxu0 0.0
    %395 = vmatpush1.msra.mxu0 0.0
    %396 = vmatprep.mubr.f32.mxu0 0.0
    %v397 = vand.u32 %v116, 4294901760
    %v398 = vsub.f32 %v116, %v397
    %399 = vmatmul.mubr.f32.gmra.mrb[0].mxu0 %v398
    %v400 = vpop.f32.mrb[0].mxu0
    %v401 = vadd.f32 %v309, %v400
    %v402 = vpop.f32.mrb[0].mxu0
    %403 = vmatprep.mubr.f32.mxu0 0.0
    %v404 = vand.u32 %v119, 4294901760
    %v405 = vsub.f32 %v119, %v404
    %406 = vmatmul.mubr.f32.gmra.mrb[0].mxu0 %v405
    %v407 = vpop.f32.mrb[0].mxu0
    %v408 = vadd.f32 %v315, %v407
    %v409 = vpop.f32.mrb[0].mxu0
    %410 = vmatprep.mubr.f32.mxu0 0.0
    %v411 = vand.u32 %v122, 4294901760
    %v412 = vsub.f32 %v122, %v411
    %413 = vmatmul.mubr.f32.gmra.mrb[0].mxu0 %v412
    %v414 = vpop.f32.mrb[0].mxu0
    %v415 = vadd.f32 %v321, %v414
    %v416 = vpop.f32.mrb[0].mxu0
    %417 = vmatprep.mubr.f32.mxu0 0.0
    %v418 = vand.u32 %v125, 4294901760
    %v419 = vsub.f32 %v125, %v418
    %420 = vmatmul.mubr.f32.gmra.mrb[0].mxu0 %v419
    %v421 = vpop.f32.mrb[0].mxu0
    %v422 = vadd.f32 %v327, %v421
    %v423 = vpop.f32.mrb[0].mxu0
    %424 = vdwg.mxu0
    %425 = vmatprep.subr.mxu0 0.0
    %v426 = vand.u32 %v128, 4294901760
    %427 = vmatpush1.msra.mxu0 %v426
    %428 = vmatprep.subr.mxu0 0.0
    %429 = vmatpush1.msra.mxu0 0.0
    %430 = vmatprep.subr.mxu0 0.0
    %431 = vmatpush1.msra.mxu0 0.0
    %432 = vmatprep.subr.mxu0 0.0
    %433 = vmatpush1.msra.mxu0 0.0
    %434 = vmatprep.subr.mxu0 0.0
    %435 = vmatpush1.msra.mxu0 0.0
    %436 = vmatprep.subr.mxu0 0.0
    %437 = vmatpush1.msra.mxu0 0.0
    %438 = vmatprep.subr.mxu0 0.0
    %439 = vmatpush1.msra.mxu0 0.0
    %440 = vmatprep.subr.mxu0 0.0
    %441 = vmatpush1.msra.mxu0 0.0
    %442 = vmatprep.subr.mxu0 0.0
    %443 = vmatpush1.msra.mxu0 0.0
    %444 = vmatprep.subr.mxu0 0.0
    %445 = vmatpush1.msra.mxu0 0.0
    %446 = vmatprep.subr.mxu0 0.0
    %447 = vmatpush1.msra.mxu0 0.0
    %448 = vmatprep.subr.mxu0 0.0
    %449 = vmatpush1.msra.mxu0 0.0
    %450 = vmatprep.subr.mxu0 0.0
    %451 = vmatpush1.msra.mxu0 0.0
    %452 = vmatprep.subr.mxu0 0.0
    %453 = vmatpush1.msra.mxu0 0.0
    %454 = vmatprep.subr.mxu0 0.0
    %455 = vmatpush1.msra.mxu0 0.0
    %456 = vmatprep.subr.mxu0 0.0
    %457 = vmatpush1.msra.mxu0 0.0
    %458 = vmatprep.subr.mxu0 0.0
    %459 = vmatpush1.msra.mxu0 0.0
    %460 = vmatprep.subr.mxu0 0.0
    %461 = vmatpush1.msra.mxu0 0.0
    %462 = vmatprep.subr.mxu0 0.0
    %463 = vmatpush1.msra.mxu0 0.0
    %464 = vmatprep.subr.mxu0 0.0
    %465 = vmatpush1.msra.mxu0 0.0
    %466 = vmatprep.subr.mxu0 0.0
    %467 = vmatpush1.msra.mxu0 0.0
    %468 = vmatprep.subr.mxu0 0.0
    %469 = vmatpush1.msra.mxu0 0.0
    %470 = vmatprep.subr.mxu0 0.0
    %471 = vmatpush1.msra.mxu0 0.0
    %472 = vmatprep.subr.mxu0 0.0
    %473 = vmatpush1.msra.mxu0 0.0
    %474 = vmatprep.subr.mxu0 0.0
    %475 = vmatpush1.msra.mxu0 0.0
    %476 = vmatprep.subr.mxu0 0.0
    %477 = vmatpush1.msra.mxu0 0.0
    %478 = vmatprep.subr.mxu0 0.0
    %479 = vmatpush1.msra.mxu0 0.0
    %480 = vmatprep.subr.mxu0 0.0
    %481 = vmatpush1.msra.mxu0 0.0
    %482 = vmatprep.subr.mxu0 0.0
    %483 = vmatpush1.msra.mxu0 0.0
    %484 = vmatprep.subr.mxu0 0.0
    %485 = vmatpush1.msra.mxu0 0.0
    %486 = vmatprep.subr.mxu0 0.0
    %487 = vmatpush1.msra.mxu0 0.0
    %488 = vmatprep.subr.mxu0 0.0
    %489 = vmatpush1.msra.mxu0 0.0
    %490 = vmatprep.mubr.f32.mxu0 0.0
    %v491 = vand.u32 %v116, 4294901760
    %v492 = vsub.f32 %v116, %v491
    %v493 = vand.u32 %v492, 4294901760
    %494 = vmatmul.mubr.f32.gmra.mrb[0].mxu0 %v493
    %v495 = vpop.f32.mrb[0].mxu0
    %v496 = vadd.f32 %v401, %v495
    %v497 = vpop.f32.mrb[0].mxu0
    %498 = vmatprep.mubr.f32.mxu0 0.0
    %v499 = vand.u32 %v119, 4294901760
    %v500 = vsub.f32 %v119, %v499
    %v501 = vand.u32 %v500, 4294901760
    %502 = vmatmul.mubr.f32.gmra.mrb[0].mxu0 %v501
    %v503 = vpop.f32.mrb[0].mxu0
    %v504 = vadd.f32 %v408, %v503
    %v505 = vpop.f32.mrb[0].mxu0
    %506 = vmatprep.mubr.f32.mxu0 0.0
    %v507 = vand.u32 %v122, 4294901760
    %v508 = vsub.f32 %v122, %v507
    %v509 = vand.u32 %v508, 4294901760
    %510 = vmatmul.mubr.f32.gmra.mrb[0].mxu0 %v509
    %v511 = vpop.f32.mrb[0].mxu0
    %v512 = vadd.f32 %v415, %v511
    %v513 = vpop.f32.mrb[0].mxu0
    %514 = vmatprep.mubr.f32.mxu0 0.0
    %v515 = vand.u32 %v125, 4294901760
    %v516 = vsub.f32 %v125, %v515
    %v517 = vand.u32 %v516, 4294901760
    %518 = vmatmul.mubr.f32.gmra.mrb[0].mxu0 %v517
    %v519 = vpop.f32.mrb[0].mxu0
    %v520 = vadd.f32 %v422, %v519
    %v521 = vpop.f32.mrb[0].mxu0
    %522 = vdwg.mxu0
    %523 = vmatprep.subr.mxu0 0.0
    %v524 = vand.u32 %v128, 4294901760
    %v525 = vsub.f32 %v128, %v524
    %v526 = vand.u32 %v525, 4294901760
    %527 = vmatpush1.msra.mxu0 %v526
    %528 = vmatprep.subr.mxu0 0.0
    %529 = vmatpush1.msra.mxu0 0.0
    %530 = vmatprep.subr.mxu0 0.0
    %531 = vmatpush1.msra.mxu0 0.0
    %532 = vmatprep.subr.mxu0 0.0
    %533 = vmatpush1.msra.mxu0 0.0
    %534 = vmatprep.subr.mxu0 0.0
    %535 = vmatpush1.msra.mxu0 0.0
    %536 = vmatprep.subr.mxu0 0.0
    %537 = vmatpush1.msra.mxu0 0.0
    %538 = vmatprep.subr.mxu0 0.0
    %539 = vmatpush1.msra.mxu0 0.0
    %540 = vmatprep.subr.mxu0 0.0
    %541 = vmatpush1.msra.mxu0 0.0
    %542 = vmatprep.subr.mxu0 0.0
    %543 = vmatpush1.msra.mxu0 0.0
    %544 = vmatprep.subr.mxu0 0.0
    %545 = vmatpush1.msra.mxu0 0.0
    %546 = vmatprep.subr.mxu0 0.0
    %547 = vmatpush1.msra.mxu0 0.0
    %548 = vmatprep.subr.mxu0 0.0
    %549 = vmatpush1.msra.mxu0 0.0
    %550 = vmatprep.subr.mxu0 0.0
    %551 = vmatpush1.msra.mxu0 0.0
    %552 = vmatprep.subr.mxu0 0.0
    %553 = vmatpush1.msra.mxu0 0.0
    %554 = vmatprep.subr.mxu0 0.0
    %555 = vmatpush1.msra.mxu0 0.0
    %556 = vmatprep.subr.mxu0 0.0
    %557 = vmatpush1.msra.mxu0 0.0
    %558 = vmatprep.subr.mxu0 0.0
    %559 = vmatpush1.msra.mxu0 0.0
    %560 = vmatprep.subr.mxu0 0.0
    %561 = vmatpush1.msra.mxu0 0.0
    %562 = vmatprep.subr.mxu0 0.0
    %563 = vmatpush1.msra.mxu0 0.0
    %564 = vmatprep.subr.mxu0 0.0
    %565 = vmatpush1.msra.mxu0 0.0
    %566 = vmatprep.subr.mxu0 0.0
    %567 = vmatpush1.msra.mxu0 0.0
    %568 = vmatprep.subr.mxu0 0.0
    %569 = vmatpush1.msra.mxu0 0.0
    %570 = vmatprep.subr.mxu0 0.0
    %571 = vmatpush1.msra.mxu0 0.0
    %572 = vmatprep.subr.mxu0 0.0
    %573 = vmatpush1.msra.mxu0 0.0
    %574 = vmatprep.subr.mxu0 0.0
    %575 = vmatpush1.msra.mxu0 0.0
    %576 = vmatprep.subr.mxu0 0.0
    %577 = vmatpush1.msra.mxu0 0.0
    %578 = vmatprep.subr.mxu0 0.0
    %579 = vmatpush1.msra.mxu0 0.0
    %580 = vmatprep.subr.mxu0 0.0
    %581 = vmatpush1.msra.mxu0 0.0
    %582 = vmatprep.subr.mxu0 0.0
    %583 = vmatpush1.msra.mxu0 0.0
    %584 = vmatprep.subr.mxu0 0.0
    %585 = vmatpush1.msra.mxu0 0.0
    %586 = vmatprep.subr.mxu0 0.0
    %587 = vmatpush1.msra.mxu0 0.0
    %588 = vmatprep.subr.mxu0 0.0
    %589 = vmatpush1.msra.mxu0 0.0
    %590 = vmatprep.mubr.f32.mxu0 0.0
    %v591 = vand.u32 %v116, 4294901760
    %592 = vmatmul.mubr.f32.gmra.mrb[0].mxu0 %v591
    %v593 = vpop.f32.mrb[0].mxu0
    %v594 = vadd.f32 %v496, %v593
    %v595 = vpop.f32.mrb[0].mxu0
    %596 = vmatprep.mubr.f32.mxu0 0.0
    %v597 = vand.u32 %v119, 4294901760
    %598 = vmatmul.mubr.f32.gmra.mrb[0].mxu0 %v597
    %v599 = vpop.f32.mrb[0].mxu0
    %v600 = vadd.f32 %v504, %v599
    %v601 = vpop.f32.mrb[0].mxu0
    %602 = vmatprep.mubr.f32.mxu0 0.0
    %v603 = vand.u32 %v122, 4294901760
    %604 = vmatmul.mubr.f32.gmra.mrb[0].mxu0 %v603
    %v605 = vpop.f32.mrb[0].mxu0
    %v606 = vadd.f32 %v512, %v605
    %v607 = vpop.f32.mrb[0].mxu0
    %608 = vmatprep.mubr.f32.mxu0 0.0
    %v609 = vand.u32 %v125, 4294901760
    %610 = vmatmul.mubr.f32.gmra.mrb[0].mxu0 %v609
    %v611 = vpop.f32.mrb[0].mxu0
    %v612 = vadd.f32 %v520, %v611
    %v613 = vpop.f32.mrb[0].mxu0
    %614 = vdwg.mxu0
    %615 = vmatprep.subr.mxu0 0.0
    %v616 = vand.u32 %v128, 4294901760
    %617 = vmatpush1.msra.mxu0 %v616
    %618 = vmatprep.subr.mxu0 0.0
    %619 = vmatpush1.msra.mxu0 0.0
    %620 = vmatprep.subr.mxu0 0.0
    %621 = vmatpush1.msra.mxu0 0.0
    %622 = vmatprep.subr.mxu0 0.0
    %623 = vmatpush1.msra.mxu0 0.0
    %624 = vmatprep.subr.mxu0 0.0
    %625 = vmatpush1.msra.mxu0 0.0
    %626 = vmatprep.subr.mxu0 0.0
    %627 = vmatpush1.msra.mxu0 0.0
    %628 = vmatprep.subr.mxu0 0.0
    %629 = vmatpush1.msra.mxu0 0.0
    %630 = vmatprep.subr.mxu0 0.0
    %631 = vmatpush1.msra.mxu0 0.0
    %632 = vmatprep.subr.mxu0 0.0
    %633 = vmatpush1.msra.mxu0 0.0
    %634 = vmatprep.subr.mxu0 0.0
    %635 = vmatpush1.msra.mxu0 0.0
    %636 = vmatprep.subr.mxu0 0.0
    %637 = vmatpush1.msra.mxu0 0.0
    %638 = vmatprep.subr.mxu0 0.0
    %639 = vmatpush1.msra.mxu0 0.0
    %640 = vmatprep.subr.mxu0 0.0
    %641 = vmatpush1.msra.mxu0 0.0
    %642 = vmatprep.subr.mxu0 0.0
    %643 = vmatpush1.msra.mxu0 0.0
    %644 = vmatprep.subr.mxu0 0.0
    %645 = vmatpush1.msra.mxu0 0.0
    %646 = vmatprep.subr.mxu0 0.0
    %647 = vmatpush1.msra.mxu0 0.0
    %648 = vmatprep.subr.mxu0 0.0
    %649 = vmatpush1.msra.mxu0 0.0
    %650 = vmatprep.subr.mxu0 0.0
    %651 = vmatpush1.msra.mxu0 0.0
    %652 = vmatprep.subr.mxu0 0.0
    %653 = vmatpush1.msra.mxu0 0.0
    %654 = vmatprep.subr.mxu0 0.0
    %655 = vmatpush1.msra.mxu0 0.0
    %656 = vmatprep.subr.mxu0 0.0
    %657 = vmatpush1.msra.mxu0 0.0
    %658 = vmatprep.subr.mxu0 0.0
    %659 = vmatpush1.msra.mxu0 0.0
    %660 = vmatprep.subr.mxu0 0.0
    %661 = vmatpush1.msra.mxu0 0.0
    %662 = vmatprep.subr.mxu0 0.0
    %663 = vmatpush1.msra.mxu0 0.0
    %664 = vmatprep.subr.mxu0 0.0
    %665 = vmatpush1.msra.mxu0 0.0
    %666 = vmatprep.subr.mxu0 0.0
    %667 = vmatpush1.msra.mxu0 0.0
    %668 = vmatprep.subr.mxu0 0.0
    %669 = vmatpush1.msra.mxu0 0.0
    %670 = vmatprep.subr.mxu0 0.0
    %671 = vmatpush1.msra.mxu0 0.0
    %672 = vmatprep.subr.mxu0 0.0
    %673 = vmatpush1.msra.mxu0 0.0
    %674 = vmatprep.subr.mxu0 0.0
    %675 = vmatpush1.msra.mxu0 0.0
    %676 = vmatprep.subr.mxu0 0.0
    %677 = vmatpush1.msra.mxu0 0.0
    %678 = vmatprep.subr.mxu0 0.0
    %679 = vmatpush1.msra.mxu0 0.0
    %680 = vmatprep.mubr.f32.mxu0 0.0
    %v681 = vand.u32 %v116, 4294901760
    %682 = vmatmul.mubr.f32.gmra.mrb[0].mxu0 %v681
    %v683 = vpop.f32.mrb[0].mxu0
    %v684 = vadd.f32 %v594, %v683
    %v685 = vpop.f32.mrb[0].mxu0
    %686 = vmatprep.mubr.f32.mxu0 0.0
    %v687 = vand.u32 %v119, 4294901760
    %688 = vmatmul.mubr.f32.gmra.mrb[0].mxu0 %v687
    %v689 = vpop.f32.mrb[0].mxu0
    %v690 = vadd.f32 %v600, %v689
    %v691 = vpop.f32.mrb[0].mxu0
    %692 = vmatprep.mubr.f32.mxu0 0.0
    %v693 = vand.u32 %v122, 4294901760
    %694 = vmatmul.mubr.f32.gmra.mrb[0].mxu0 %v693
    %v695 = vpop.f32.mrb[0].mxu0
    %v696 = vadd.f32 %v606, %v695
    %v697 = vpop.f32.mrb[0].mxu0
    %698 = vmatprep.mubr.f32.mxu0 0.0
    %v699 = vand.u32 %v125, 4294901760
    %700 = vmatmul.mubr.f32.gmra.mrb[0].mxu0 %v699
    %v701 = vpop.f32.mrb[0].mxu0
    %v702 = vadd.f32 %v612, %v701
    %v703 = vpop.f32.mrb[0].mxu0
    %704 = vdwg.mxu0
    %vm705 = vcmask 277504
    %v707 = vsel %vm705, %v100, 0
    %v710 = vsel %vm705, %v101, 0
    %v713 = vsel %vm705, %v102, 0
    %v716 = vsel %vm705, %v103, 0
    %vm718 = vcmask 1041408
    %v720 = vsel %vm718, %v82, 0
    %722 = vmatprep.subr.mxu0 0.0
    %v723 = vand.u32 %v78, 4294901760
    %724 = vmatpush1.msra.mxu0 %v723
    %725 = vmatprep.subr.mxu0 0.0
    %v726 = vand.u32 %v79, 4294901760
    %727 = vmatpush1.msra.mxu0 %v726
    %728 = vmatprep.subr.mxu0 0.0
    %v729 = vand.u32 %v80, 4294901760
    %730 = vmatpush1.msra.mxu0 %v729
    %731 = vmatprep.subr.mxu0 0.0
    %v732 = vand.u32 %v81, 4294901760
    %733 = vmatpush1.msra.mxu0 %v732
    %734 = vmatprep.subr.mxu0 0.0
    %v735 = vand.u32 %v720, 4294901760
    %736 = vmatpush1.msra.mxu0 %v735
    %737 = vmatprep.subr.mxu0 0.0
    %738 = vmatpush1.msra.mxu0 0.0
    %739 = vmatprep.subr.mxu0 0.0
    %740 = vmatpush1.msra.mxu0 0.0
    %741 = vmatprep.subr.mxu0 0.0
    %742 = vmatpush1.msra.mxu0 0.0
    %743 = vmatprep.subr.mxu0 0.0
    %744 = vmatpush1.msra.mxu0 0.0
    %745 = vmatprep.subr.mxu0 0.0
    %746 = vmatpush1.msra.mxu0 0.0
    %747 = vmatprep.subr.mxu0 0.0
    %748 = vmatpush1.msra.mxu0 0.0
    %749 = vmatprep.subr.mxu0 0.0
    %750 = vmatpush1.msra.mxu0 0.0
    %751 = vmatprep.subr.mxu0 0.0
    %752 = vmatpush1.msra.mxu0 0.0
    %753 = vmatprep.subr.mxu0 0.0
    %754 = vmatpush1.msra.mxu0 0.0
    %755 = vmatprep.subr.mxu0 0.0
    %756 = vmatpush1.msra.mxu0 0.0
    %757 = vmatprep.subr.mxu0 0.0
    %758 = vmatpush1.msra.mxu0 0.0
    %759 = vmatprep.subr.mxu0 0.0
    %760 = vmatpush1.msra.mxu0 0.0
    %761 = vmatprep.subr.mxu0 0.0
    %762 = vmatpush1.msra.mxu0 0.0
    %763 = vmatprep.subr.mxu0 0.0
    %764 = vmatpush1.msra.mxu0 0.0
    %765 = vmatprep.subr.mxu0 0.0
    %766 = vmatpush1.msra.mxu0 0.0
    %767 = vmatprep.subr.mxu0 0.0
    %768 = vmatpush1.msra.mxu0 0.0
    %769 = vmatprep.subr.mxu0 0.0
    %770 = vmatpush1.msra.mxu0 0.0
    %771 = vmatprep.subr.mxu0 0.0
    %772 = vmatpush1.msra.mxu0 0.0
    %773 = vmatprep.subr.mxu0 0.0
    %774 = vmatpush1.msra.mxu0 0.0
    %775 = vmatprep.subr.mxu0 0.0
    %776 = vmatpush1.msra.mxu0 0.0
    %777 = vmatprep.subr.mxu0 0.0
    %778 = vmatpush1.msra.mxu0 0.0
    %779 = vmatprep.subr.mxu0 0.0
    %780 = vmatpush1.msra.mxu0 0.0
    %781 = vmatprep.subr.mxu0 0.0
    %782 = vmatpush1.msra.mxu0 0.0
    %783 = vmatprep.subr.mxu0 0.0
    %784 = vmatpush1.msra.mxu0 0.0
    %785 = vmatprep.subr.mxu0 0.0
    %786 = vmatpush1.msra.mxu0 0.0
    %787 = vmatprep.subr.mxu0 0.0
    %788 = vmatpush1.msra.mxu0 0.0
    %789 = vmatprep.subr.mxu0 0.0
    %790 = vmatpush1.msra.mxu0 0.0
    %791 = vmatprep.mubr.f32.mxu0 0.0
    %v792 = vand.u32 %v707, 4294901760
    %v793 = vsub.f32 %v707, %v792
    %v794 = vand.u32 %v793, 4294901760
    %v795 = vsub.f32 %v793, %v794
    %v796 = vand.u32 %v795, 4294901760
    %797 = vmatmul.mubr.f32.gmra.mrb[0].mxu0 %v796
    %v798 = vpop.f32.mrb[0].mxu0
    %v799 = vadd.f32 %v684, %v798
    %v800 = vpop.f32.mrb[0].mxu0
    %801 = vmatprep.mubr.f32.mxu0 0.0
    %v802 = vand.u32 %v710, 4294901760
    %v803 = vsub.f32 %v710, %v802
    %v804 = vand.u32 %v803, 4294901760
    %v805 = vsub.f32 %v803, %v804
    %v806 = vand.u32 %v805, 4294901760
    %807 = vmatmul.mubr.f32.gmra.mrb[0].mxu0 %v806
    %v808 = vpop.f32.mrb[0].mxu0
    %v809 = vadd.f32 %v690, %v808
    %v810 = vpop.f32.mrb[0].mxu0
    %811 = vmatprep.mubr.f32.mxu0 0.0
    %v812 = vand.u32 %v713, 4294901760
    %v813 = vsub.f32 %v713, %v812
    %v814 = vand.u32 %v813, 4294901760
    %v815 = vsub.f32 %v813, %v814
    %v816 = vand.u32 %v815, 4294901760
    %817 = vmatmul.mubr.f32.gmra.mrb[0].mxu0 %v816
    %v818 = vpop.f32.mrb[0].mxu0
    %v819 = vadd.f32 %v696, %v818
    %v820 = vpop.f32.mrb[0].mxu0
    %821 = vmatprep.mubr.f32.mxu0 0.0
    %v822 = vand.u32 %v716, 4294901760
    %v823 = vsub.f32 %v716, %v822
    %v824 = vand.u32 %v823, 4294901760
    %v825 = vsub.f32 %v823, %v824
    %v826 = vand.u32 %v825, 4294901760
    %827 = vmatmul.mubr.f32.gmra.mrb[0].mxu0 %v826
    %v828 = vpop.f32.mrb[0].mxu0
    %v829 = vadd.f32 %v702, %v828
    %v830 = vpop.f32.mrb[0].mxu0
    %831 = vdwg.mxu0
    %832 = vmatprep.subr.mxu0 0.0
    %v833 = vand.u32 %v78, 4294901760
    %v834 = vsub.f32 %v78, %v833
    %v835 = vand.u32 %v834, 4294901760
    %v836 = vsub.f32 %v834, %v835
    %v837 = vand.u32 %v836, 4294901760
    %838 = vmatpush1.msra.mxu0 %v837
    %839 = vmatprep.subr.mxu0 0.0
    %v840 = vand.u32 %v79, 4294901760
    %v841 = vsub.f32 %v79, %v840
    %v842 = vand.u32 %v841, 4294901760
    %v843 = vsub.f32 %v841, %v842
    %v844 = vand.u32 %v843, 4294901760
    %845 = vmatpush1.msra.mxu0 %v844
    %846 = vmatprep.subr.mxu0 0.0
    %v847 = vand.u32 %v80, 4294901760
    %v848 = vsub.f32 %v80, %v847
    %v849 = vand.u32 %v848, 4294901760
    %v850 = vsub.f32 %v848, %v849
    %v851 = vand.u32 %v850, 4294901760
    %852 = vmatpush1.msra.mxu0 %v851
    %853 = vmatprep.subr.mxu0 0.0
    %v854 = vand.u32 %v81, 4294901760
    %v855 = vsub.f32 %v81, %v854
    %v856 = vand.u32 %v855, 4294901760
    %v857 = vsub.f32 %v855, %v856
    %v858 = vand.u32 %v857, 4294901760
    %859 = vmatpush1.msra.mxu0 %v858
    %860 = vmatprep.subr.mxu0 0.0
    %v861 = vand.u32 %v720, 4294901760
    %v862 = vsub.f32 %v720, %v861
    %v863 = vand.u32 %v862, 4294901760
    %v864 = vsub.f32 %v862, %v863
    %v865 = vand.u32 %v864, 4294901760
    %866 = vmatpush1.msra.mxu0 %v865
    %867 = vmatprep.subr.mxu0 0.0
    %868 = vmatpush1.msra.mxu0 0.0
    %869 = vmatprep.subr.mxu0 0.0
    %870 = vmatpush1.msra.mxu0 0.0
    %871 = vmatprep.subr.mxu0 0.0
    %872 = vmatpush1.msra.mxu0 0.0
    %873 = vmatprep.subr.mxu0 0.0
    %874 = vmatpush1.msra.mxu0 0.0
    %875 = vmatprep.subr.mxu0 0.0
    %876 = vmatpush1.msra.mxu0 0.0
    %877 = vmatprep.subr.mxu0 0.0
    %878 = vmatpush1.msra.mxu0 0.0
    %879 = vmatprep.subr.mxu0 0.0
    %880 = vmatpush1.msra.mxu0 0.0
    %881 = vmatprep.subr.mxu0 0.0
    %882 = vmatpush1.msra.mxu0 0.0
    %883 = vmatprep.subr.mxu0 0.0
    %884 = vmatpush1.msra.mxu0 0.0
    %885 = vmatprep.subr.mxu0 0.0
    %886 = vmatpush1.msra.mxu0 0.0
    %887 = vmatprep.subr.mxu0 0.0
    %888 = vmatpush1.msra.mxu0 0.0
    %889 = vmatprep.subr.mxu0 0.0
    %890 = vmatpush1.msra.mxu0 0.0
    %891 = vmatprep.subr.mxu0 0.0
    %892 = vmatpush1.msra.mxu0 0.0
    %893 = vmatprep.subr.mxu0 0.0
    %894 = vmatpush1.msra.mxu0 0.0
    %895 = vmatprep.subr.mxu0 0.0
    %896 = vmatpush1.msra.mxu0 0.0
    %897 = vmatprep.subr.mxu0 0.0
    %898 = vmatpush1.msra.mxu0 0.0
    %899 = vmatprep.subr.mxu0 0.0
    %900 = vmatpush1.msra.mxu0 0.0
    %901 = vmatprep.subr.mxu0 0.0
    %902 = vmatpush1.msra.mxu0 0.0
    %903 = vmatprep.subr.mxu0 0.0
    %904 = vmatpush1.msra.mxu0 0.0
    %905 = vmatprep.subr.mxu0 0.0
    %906 = vmatpush1.msra.mxu0 0.0
    %907 = vmatprep.subr.mxu0 0.0
    %908 = vmatpush1.msra.mxu0 0.0
    %909 = vmatprep.subr.mxu0 0.0
    %910 = vmatpush1.msra.mxu0 0.0
    %911 = vmatprep.subr.mxu0 0.0
    %912 = vmatpush1.msra.mxu0 0.0
    %913 = vmatprep.subr.mxu0 0.0
    %914 = vmatpush1.msra.mxu0 0.0
    %915 = vmatprep.subr.mxu0 0.0
    %916 = vmatpush1.msra.mxu0 0.0
    %917 = vmatprep.subr.mxu0 0.0
    %918 = vmatpush1.msra.mxu0 0.0
    %919 = vmatprep.subr.mxu0 0.0
    %920 = vmatpush1.msra.mxu0 0.0
    %921 = vmatprep.mubr.f32.mxu0 0.0
    %v922 = vand.u32 %v707, 4294901760
    %923 = vmatmul.mubr.f32.gmra.mrb[0].mxu0 %v922
    %v924 = vpop.f32.mrb[0].mxu0
    %v925 = vadd.f32 %v799, %v924
    %v926 = vpop.f32.mrb[0].mxu0
    %927 = vmatprep.mubr.f32.mxu0 0.0
    %v928 = vand.u32 %v710, 4294901760
    %929 = vmatmul.mubr.f32.gmra.mrb[0].mxu0 %v928
    %v930 = vpop.f32.mrb[0].mxu0
    %v931 = vadd.f32 %v809, %v930
    %v932 = vpop.f32.mrb[0].mxu0
    %933 = vmatprep.mubr.f32.mxu0 0.0
    %v934 = vand.u32 %v713, 4294901760
    %935 = vmatmul.mubr.f32.gmra.mrb[0].mxu0 %v934
    %v936 = vpop.f32.mrb[0].mxu0
    %v937 = vadd.f32 %v819, %v936
    %v938 = vpop.f32.mrb[0].mxu0
    %939 = vmatprep.mubr.f32.mxu0 0.0
    %v940 = vand.u32 %v716, 4294901760
    %941 = vmatmul.mubr.f32.gmra.mrb[0].mxu0 %v940
    %v942 = vpop.f32.mrb[0].mxu0
    %v943 = vadd.f32 %v829, %v942
    %v944 = vpop.f32.mrb[0].mxu0
    %945 = vdwg.mxu0
    %946 = vmatprep.subr.mxu0 0.0
    %v947 = vand.u32 %v78, 4294901760
    %v948 = vsub.f32 %v78, %v947
    %949 = vmatpush1.msra.mxu0 %v948
    %950 = vmatprep.subr.mxu0 0.0
    %v951 = vand.u32 %v79, 4294901760
    %v952 = vsub.f32 %v79, %v951
    %953 = vmatpush1.msra.mxu0 %v952
    %954 = vmatprep.subr.mxu0 0.0
    %v955 = vand.u32 %v80, 4294901760
    %v956 = vsub.f32 %v80, %v955
    %957 = vmatpush1.msra.mxu0 %v956
    %958 = vmatprep.subr.mxu0 0.0
    %v959 = vand.u32 %v81, 4294901760
    %v960 = vsub.f32 %v81, %v959
    %961 = vmatpush1.msra.mxu0 %v960
    %962 = vmatprep.subr.mxu0 0.0
    %v963 = vand.u32 %v720, 4294901760
    %v964 = vsub.f32 %v720, %v963
    %965 = vmatpush1.msra.mxu0 %v964
    %966 = vmatprep.subr.mxu0 0.0
    %967 = vmatpush1.msra.mxu0 0.0
    %968 = vmatprep.subr.mxu0 0.0
    %969 = vmatpush1.msra.mxu0 0.0
    %970 = vmatprep.subr.mxu0 0.0
    %971 = vmatpush1.msra.mxu0 0.0
    %972 = vmatprep.subr.mxu0 0.0
    %973 = vmatpush1.msra.mxu0 0.0
    %974 = vmatprep.subr.mxu0 0.0
    %975 = vmatpush1.msra.mxu0 0.0
    %976 = vmatprep.subr.mxu0 0.0
    %977 = vmatpush1.msra.mxu0 0.0
    %978 = vmatprep.subr.mxu0 0.0
    %979 = vmatpush1.msra.mxu0 0.0
    %980 = vmatprep.subr.mxu0 0.0
    %981 = vmatpush1.msra.mxu0 0.0
    %982 = vmatprep.subr.mxu0 0.0
    %983 = vmatpush1.msra.mxu0 0.0
    %984 = vmatprep.subr.mxu0 0.0
    %985 = vmatpush1.msra.mxu0 0.0
    %986 = vmatprep.subr.mxu0 0.0
    %987 = vmatpush1.msra.mxu0 0.0
    %988 = vmatprep.subr.mxu0 0.0
    %989 = vmatpush1.msra.mxu0 0.0
    %990 = vmatprep.subr.mxu0 0.0
    %991 = vmatpush1.msra.mxu0 0.0
    %992 = vmatprep.subr.mxu0 0.0
    %993 = vmatpush1.msra.mxu0 0.0
    %994 = vmatprep.subr.mxu0 0.0
    %995 = vmatpush1.msra.mxu0 0.0
    %996 = vmatprep.subr.mxu0 0.0
    %997 = vmatpush1.msra.mxu0 0.0
    %998 = vmatprep.subr.mxu0 0.0
    %999 = vmatpush1.msra.mxu0 0.0
    %1000 = vmatprep.subr.mxu0 0.0
    %1001 = vmatpush1.msra.mxu0 0.0
    %1002 = vmatprep.subr.mxu0 0.0
    %1003 = vmatpush1.msra.mxu0 0.0
    %1004 = vmatprep.subr.mxu0 0.0
    %1005 = vmatpush1.msra.mxu0 0.0
    %1006 = vmatprep.subr.mxu0 0.0
    %1007 = vmatpush1.msra.mxu0 0.0
    %1008 = vmatprep.subr.mxu0 0.0
    %1009 = vmatpush1.msra.mxu0 0.0
    %1010 = vmatprep.subr.mxu0 0.0
    %1011 = vmatpush1.msra.mxu0 0.0
    %1012 = vmatprep.subr.mxu0 0.0
    %1013 = vmatpush1.msra.mxu0 0.0
    %1014 = vmatprep.subr.mxu0 0.0
    %1015 = vmatpush1.msra.mxu0 0.0
    %1016 = vmatprep.subr.mxu0 0.0
    %1017 = vmatpush1.msra.mxu0 0.0
    %1018 = vmatprep.subr.mxu0 0.0
    %1019 = vmatpush1.msra.mxu0 0.0
    %1020 = vmatprep.mubr.f32.mxu0 0.0
    %v1021 = vand.u32 %v707, 4294901760
    %v1022 = vsub.f32 %v707, %v1021
    %1023 = vmatmul.mubr.f32.gmra.mrb[0].mxu0 %v1022
    %v1024 = vpop.f32.mrb[0].mxu0
    %v1025 = vadd.f32 %v925, %v1024
    %v1026 = vpop.f32.mrb[0].mxu0
    %1027 = vmatprep.mubr.f32.mxu0 0.0
    %v1028 = vand.u32 %v710, 4294901760
    %v1029 = vsub.f32 %v710, %v1028
    %1030 = vmatmul.mubr.f32.gmra.mrb[0].mxu0 %v1029
    %v1031 = vpop.f32.mrb[0].mxu0
    %v1032 = vadd.f32 %v931, %v1031
    %v1033 = vpop.f32.mrb[0].mxu0
    %1034 = vmatprep.mubr.f32.mxu0 0.0
    %v1035 = vand.u32 %v713, 4294901760
    %v1036 = vsub.f32 %v713, %v1035
    %1037 = vmatmul.mubr.f32.gmra.mrb[0].mxu0 %v1036
    %v1038 = vpop.f32.mrb[0].mxu0
    %v1039 = vadd.f32 %v937, %v1038
    %v1040 = vpop.f32.mrb[0].mxu0
    %1041 = vmatprep.mubr.f32.mxu0 0.0
    %v1042 = vand.u32 %v716, 4294901760
    %v1043 = vsub.f32 %v716, %v1042
    %1044 = vmatmul.mubr.f32.gmra.mrb[0].mxu0 %v1043
    %v1045 = vpop.f32.mrb[0].mxu0
    %v1046 = vadd.f32 %v943, %v1045
    %v1047 = vpop.f32.mrb[0].mxu0
    %1048 = vdwg.mxu0
    %1049 = vmatprep.subr.mxu0 0.0
    %v1050 = vand.u32 %v78, 4294901760
    %1051 = vmatpush1.msra.mxu0 %v1050
    %1052 = vmatprep.subr.mxu0 0.0
    %v1053 = vand.u32 %v79, 4294901760
    %1054 = vmatpush1.msra.mxu0 %v1053
    %1055 = vmatprep.subr.mxu0 0.0
    %v1056 = vand.u32 %v80, 4294901760
    %1057 = vmatpush1.msra.mxu0 %v1056
    %1058 = vmatprep.subr.mxu0 0.0
    %v1059 = vand.u32 %v81, 4294901760
    %1060 = vmatpush1.msra.mxu0 %v1059
    %1061 = vmatprep.subr.mxu0 0.0
    %v1062 = vand.u32 %v720, 4294901760
    %1063 = vmatpush1.msra.mxu0 %v1062
    %1064 = vmatprep.subr.mxu0 0.0
    %1065 = vmatpush1.msra.mxu0 0.0
    %1066 = vmatprep.subr.mxu0 0.0
    %1067 = vmatpush1.msra.mxu0 0.0
    %1068 = vmatprep.subr.mxu0 0.0
    %1069 = vmatpush1.msra.mxu0 0.0
    %1070 = vmatprep.subr.mxu0 0.0
    %1071 = vmatpush1.msra.mxu0 0.0
    %1072 = vmatprep.subr.mxu0 0.0
    %1073 = vmatpush1.msra.mxu0 0.0
    %1074 = vmatprep.subr.mxu0 0.0
    %1075 = vmatpush1.msra.mxu0 0.0
    %1076 = vmatprep.subr.mxu0 0.0
    %1077 = vmatpush1.msra.mxu0 0.0
    %1078 = vmatprep.subr.mxu0 0.0
    %1079 = vmatpush1.msra.mxu0 0.0
    %1080 = vmatprep.subr.mxu0 0.0
    %1081 = vmatpush1.msra.mxu0 0.0
    %1082 = vmatprep.subr.mxu0 0.0
    %1083 = vmatpush1.msra.mxu0 0.0
    %1084 = vmatprep.subr.mxu0 0.0
    %1085 = vmatpush1.msra.mxu0 0.0
    %1086 = vmatprep.subr.mxu0 0.0
    %1087 = vmatpush1.msra.mxu0 0.0
    %1088 = vmatprep.subr.mxu0 0.0
    %1089 = vmatpush1.msra.mxu0 0.0
    %1090 = vmatprep.subr.mxu0 0.0
    %1091 = vmatpush1.msra.mxu0 0.0
    %1092 = vmatprep.subr.mxu0 0.0
    %1093 = vmatpush1.msra.mxu0 0.0
    %1094 = vmatprep.subr.mxu0 0.0
    %1095 = vmatpush1.msra.mxu0 0.0
    %1096 = vmatprep.subr.mxu0 0.0
    %1097 = vmatpush1.msra.mxu0 0.0
    %1098 = vmatprep.subr.mxu0 0.0
    %1099 = vmatpush1.msra.mxu0 0.0
    %1100 = vmatprep.subr.mxu0 0.0
    %1101 = vmatpush1.msra.mxu0 0.0
    %1102 = vmatprep.subr.mxu0 0.0
    %1103 = vmatpush1.msra.mxu0 0.0
    %1104 = vmatprep.subr.mxu0 0.0
    %1105 = vmatpush1.msra.mxu0 0.0
    %1106 = vmatprep.subr.mxu0 0.0
    %1107 = vmatpush1.msra.mxu0 0.0
    %1108 = vmatprep.subr.mxu0 0.0
    %1109 = vmatpush1.msra.mxu0 0.0
    %1110 = vmatprep.subr.mxu0 0.0
    %1111 = vmatpush1.msra.mxu0 0.0
    %1112 = vmatprep.subr.mxu0 0.0
    %1113 = vmatpush1.msra.mxu0 0.0
    %1114 = vmatprep.subr.mxu0 0.0
    %1115 = vmatpush1.msra.mxu0 0.0
    %1116 = vmatprep.subr.mxu0 0.0
    %1117 = vmatpush1.msra.mxu0 0.0
    %1118 = vmatprep.mubr.f32.mxu0 0.0
    %v1119 = vand.u32 %v707, 4294901760
    %v1120 = vsub.f32 %v707, %v1119
    %v1121 = vand.u32 %v1120, 4294901760
    %1122 = vmatmul.mubr.f32.gmra.mrb[0].mxu0 %v1121
    %v1123 = vpop.f32.mrb[0].mxu0
    %v1124 = vadd.f32 %v1025, %v1123
    %v1125 = vpop.f32.mrb[0].mxu0
    %1126 = vmatprep.mubr.f32.mxu0 0.0
    %v1127 = vand.u32 %v710, 4294901760
    %v1128 = vsub.f32 %v710, %v1127
    %v1129 = vand.u32 %v1128, 4294901760
    %1130 = vmatmul.mubr.f32.gmra.mrb[0].mxu0 %v1129
    %v1131 = vpop.f32.mrb[0].mxu0
    %v1132 = vadd.f32 %v1032, %v1131
    %v1133 = vpop.f32.mrb[0].mxu0
    %1134 = vmatprep.mubr.f32.mxu0 0.0
    %v1135 = vand.u32 %v713, 4294901760
    %v1136 = vsub.f32 %v713, %v1135
    %v1137 = vand.u32 %v1136, 4294901760
    %1138 = vmatmul.mubr.f32.gmra.mrb[0].mxu0 %v1137
    %v1139 = vpop.f32.mrb[0].mxu0
    %v1140 = vadd.f32 %v1039, %v1139
    %v1141 = vpop.f32.mrb[0].mxu0
    %1142 = vmatprep.mubr.f32.mxu0 0.0
    %v1143 = vand.u32 %v716, 4294901760
    %v1144 = vsub.f32 %v716, %v1143
    %v1145 = vand.u32 %v1144, 4294901760
    %1146 = vmatmul.mubr.f32.gmra.mrb[0].mxu0 %v1145
    %v1147 = vpop.f32.mrb[0].mxu0
    %v1148 = vadd.f32 %v1046, %v1147
    %v1149 = vpop.f32.mrb[0].mxu0
    %1150 = vdwg.mxu0
    %1151 = vmatprep.subr.mxu0 0.0
    %v1152 = vand.u32 %v78, 4294901760
    %v1153 = vsub.f32 %v78, %v1152
    %v1154 = vand.u32 %v1153, 4294901760
    %1155 = vmatpush1.msra.mxu0 %v1154
    %1156 = vmatprep.subr.mxu0 0.0
    %v1157 = vand.u32 %v79, 4294901760
    %v1158 = vsub.f32 %v79, %v1157
    %v1159 = vand.u32 %v1158, 4294901760
    %1160 = vmatpush1.msra.mxu0 %v1159
    %1161 = vmatprep.subr.mxu0 0.0
    %v1162 = vand.u32 %v80, 4294901760
    %v1163 = vsub.f32 %v80, %v1162
    %v1164 = vand.u32 %v1163, 4294901760
    %1165 = vmatpush1.msra.mxu0 %v1164
    %1166 = vmatprep.subr.mxu0 0.0
    %v1167 = vand.u32 %v81, 4294901760
    %v1168 = vsub.f32 %v81, %v1167
    %v1169 = vand.u32 %v1168, 4294901760
    %1170 = vmatpush1.msra.mxu0 %v1169
    %1171 = vmatprep.subr.mxu0 0.0
    %v1172 = vand.u32 %v720, 4294901760
    %v1173 = vsub.f32 %v720, %v1172
    %v1174 = vand.u32 %v1173, 4294901760
    %1175 = vmatpush1.msra.mxu0 %v1174
    %1176 = vmatprep.subr.mxu0 0.0
    %1177 = vmatpush1.msra.mxu0 0.0
    %1178 = vmatprep.subr.mxu0 0.0
    %1179 = vmatpush1.msra.mxu0 0.0
    %1180 = vmatprep.subr.mxu0 0.0
    %1181 = vmatpush1.msra.mxu0 0.0
    %1182 = vmatprep.subr.mxu0 0.0
    %1183 = vmatpush1.msra.mxu0 0.0
    %1184 = vmatprep.subr.mxu0 0.0
    %1185 = vmatpush1.msra.mxu0 0.0
    %1186 = vmatprep.subr.mxu0 0.0
    %1187 = vmatpush1.msra.mxu0 0.0
    %1188 = vmatprep.subr.mxu0 0.0
    %1189 = vmatpush1.msra.mxu0 0.0
    %1190 = vmatprep.subr.mxu0 0.0
    %1191 = vmatpush1.msra.mxu0 0.0
    %1192 = vmatprep.subr.mxu0 0.0
    %1193 = vmatpush1.msra.mxu0 0.0
    %1194 = vmatprep.subr.mxu0 0.0
    %1195 = vmatpush1.msra.mxu0 0.0
    %1196 = vmatprep.subr.mxu0 0.0
    %1197 = vmatpush1.msra.mxu0 0.0
    %1198 = vmatprep.subr.mxu0 0.0
    %1199 = vmatpush1.msra.mxu0 0.0
    %1200 = vmatprep.subr.mxu0 0.0
    %1201 = vmatpush1.msra.mxu0 0.0
    %1202 = vmatprep.subr.mxu0 0.0
    %1203 = vmatpush1.msra.mxu0 0.0
    %1204 = vmatprep.subr.mxu0 0.0
    %1205 = vmatpush1.msra.mxu0 0.0
    %1206 = vmatprep.subr.mxu0 0.0
    %1207 = vmatpush1.msra.mxu0 0.0
    %1208 = vmatprep.subr.mxu0 0.0
    %1209 = vmatpush1.msra.mxu0 0.0
    %1210 = vmatprep.subr.mxu0 0.0
    %1211 = vmatpush1.msra.mxu0 0.0
    %1212 = vmatprep.subr.mxu0 0.0
    %1213 = vmatpush1.msra.mxu0 0.0
    %1214 = vmatprep.subr.mxu0 0.0
    %1215 = vmatpush1.msra.mxu0 0.0
    %1216 = vmatprep.subr.mxu0 0.0
    %1217 = vmatpush1.msra.mxu0 0.0
    %1218 = vmatprep.subr.mxu0 0.0
    %1219 = vmatpush1.msra.mxu0 0.0
    %1220 = vmatprep.subr.mxu0 0.0
    %1221 = vmatpush1.msra.mxu0 0.0
    %1222 = vmatprep.subr.mxu0 0.0
    %1223 = vmatpush1.msra.mxu0 0.0
    %1224 = vmatprep.subr.mxu0 0.0
    %1225 = vmatpush1.msra.mxu0 0.0
    %1226 = vmatprep.subr.mxu0 0.0
    %1227 = vmatpush1.msra.mxu0 0.0
    %1228 = vmatprep.subr.mxu0 0.0
    %1229 = vmatpush1.msra.mxu0 0.0
    %1230 = vmatprep.mubr.f32.mxu0 0.0
    %v1231 = vand.u32 %v707, 4294901760
    %1232 = vmatmul.mubr.f32.gmra.mrb[0].mxu0 %v1231
    %v1233 = vpop.f32.mrb[0].mxu0
    %v1234 = vadd.f32 %v1124, %v1233
    %v1235 = vpop.f32.mrb[0].mxu0
    %1236 = vmatprep.mubr.f32.mxu0 0.0
    %v1237 = vand.u32 %v710, 4294901760
    %1238 = vmatmul.mubr.f32.gmra.mrb[0].mxu0 %v1237
    %v1239 = vpop.f32.mrb[0].mxu0
    %v1240 = vadd.f32 %v1132, %v1239
    %v1241 = vpop.f32.mrb[0].mxu0
    %1242 = vmatprep.mubr.f32.mxu0 0.0
    %v1243 = vand.u32 %v713, 4294901760
    %1244 = vmatmul.mubr.f32.gmra.mrb[0].mxu0 %v1243
    %v1245 = vpop.f32.mrb[0].mxu0
    %v1246 = vadd.f32 %v1140, %v1245
    %v1247 = vpop.f32.mrb[0].mxu0
    %1248 = vmatprep.mubr.f32.mxu0 0.0
    %v1249 = vand.u32 %v716, 4294901760
    %1250 = vmatmul.mubr.f32.gmra.mrb[0].mxu0 %v1249
    %v1251 = vpop.f32.mrb[0].mxu0
    %v1252 = vadd.f32 %v1148, %v1251
    %v1253 = vpop.f32.mrb[0].mxu0
    %1254 = vdwg.mxu0
    %1255 = vmatprep.subr.mxu0 0.0
    %v1256 = vand.u32 %v78, 4294901760
    %1257 = vmatpush1.msra.mxu0 %v1256
    %1258 = vmatprep.subr.mxu0 0.0
    %v1259 = vand.u32 %v79, 4294901760
    %1260 = vmatpush1.msra.mxu0 %v1259
    %1261 = vmatprep.subr.mxu0 0.0
    %v1262 = vand.u32 %v80, 4294901760
    %1263 = vmatpush1.msra.mxu0 %v1262
    %1264 = vmatprep.subr.mxu0 0.0
    %v1265 = vand.u32 %v81, 4294901760
    %1266 = vmatpush1.msra.mxu0 %v1265
    %1267 = vmatprep.subr.mxu0 0.0
    %v1268 = vand.u32 %v720, 4294901760
    %1269 = vmatpush1.msra.mxu0 %v1268
    %1270 = vmatprep.subr.mxu0 0.0
    %1271 = vmatpush1.msra.mxu0 0.0
    %1272 = vmatprep.subr.mxu0 0.0
    %1273 = vmatpush1.msra.mxu0 0.0
    %1274 = vmatprep.subr.mxu0 0.0
    %1275 = vmatpush1.msra.mxu0 0.0
    %1276 = vmatprep.subr.mxu0 0.0
    %1277 = vmatpush1.msra.mxu0 0.0
    %1278 = vmatprep.subr.mxu0 0.0
    %1279 = vmatpush1.msra.mxu0 0.0
    %1280 = vmatprep.subr.mxu0 0.0
    %1281 = vmatpush1.msra.mxu0 0.0
    %1282 = vmatprep.subr.mxu0 0.0
    %1283 = vmatpush1.msra.mxu0 0.0
    %1284 = vmatprep.subr.mxu0 0.0
    %1285 = vmatpush1.msra.mxu0 0.0
    %1286 = vmatprep.subr.mxu0 0.0
    %1287 = vmatpush1.msra.mxu0 0.0
    %1288 = vmatprep.subr.mxu0 0.0
    %1289 = vmatpush1.msra.mxu0 0.0
    %1290 = vmatprep.subr.mxu0 0.0
    %1291 = vmatpush1.msra.mxu0 0.0
    %1292 = vmatprep.subr.mxu0 0.0
    %1293 = vmatpush1.msra.mxu0 0.0
    %1294 = vmatprep.subr.mxu0 0.0
    %1295 = vmatpush1.msra.mxu0 0.0
    %1296 = vmatprep.subr.mxu0 0.0
    %1297 = vmatpush1.msra.mxu0 0.0
    %1298 = vmatprep.subr.mxu0 0.0
    %1299 = vmatpush1.msra.mxu0 0.0
    %1300 = vmatprep.subr.mxu0 0.0
    %1301 = vmatpush1.msra.mxu0 0.0
    %1302 = vmatprep.subr.mxu0 0.0
    %1303 = vmatpush1.msra.mxu0 0.0
    %1304 = vmatprep.subr.mxu0 0.0
    %1305 = vmatpush1.msra.mxu0 0.0
    %1306 = vmatprep.subr.mxu0 0.0
    %1307 = vmatpush1.msra.mxu0 0.0
    %1308 = vmatprep.subr.mxu0 0.0
    %1309 = vmatpush1.msra.mxu0 0.0
    %1310 = vmatprep.subr.mxu0 0.0
    %1311 = vmatpush1.msra.mxu0 0.0
    %1312 = vmatprep.subr.mxu0 0.0
    %1313 = vmatpush1.msra.mxu0 0.0
    %1314 = vmatprep.subr.mxu0 0.0
    %1315 = vmatpush1.msra.mxu0 0.0
    %1316 = vmatprep.subr.mxu0 0.0
    %1317 = vmatpush1.msra.mxu0 0.0
    %1318 = vmatprep.subr.mxu0 0.0
    %1319 = vmatpush1.msra.mxu0 0.0
    %1320 = vmatprep.subr.mxu0 0.0
    %1321 = vmatpush1.msra.mxu0 0.0
    %1322 = vmatprep.subr.mxu0 0.0
    %1323 = vmatpush1.msra.mxu0 0.0
    %1324 = vmatprep.mubr.f32.mxu0 0.0
    %v1325 = vand.u32 %v707, 4294901760
    %1326 = vmatmul.mubr.f32.gmra.mrb[0].mxu0 %v1325
    %v1327 = vpop.f32.mrb[0].mxu0
    %v1328 = vadd.f32 %v1234, %v1327
    %v1329 = vpop.f32.mrb[0].mxu0
    %1330 = vmatprep.mubr.f32.mxu0 0.0
    %v1331 = vand.u32 %v710, 4294901760
    %1332 = vmatmul.mubr.f32.gmra.mrb[0].mxu0 %v1331
    %v1333 = vpop.f32.mrb[0].mxu0
    %v1334 = vadd.f32 %v1240, %v1333
    %v1335 = vpop.f32.mrb[0].mxu0
    %1336 = vmatprep.mubr.f32.mxu0 0.0
    %v1337 = vand.u32 %v713, 4294901760
    %1338 = vmatmul.mubr.f32.gmra.mrb[0].mxu0 %v1337
    %v1339 = vpop.f32.mrb[0].mxu0
    %v1340 = vadd.f32 %v1246, %v1339
    %v1341 = vpop.f32.mrb[0].mxu0
    %1342 = vmatprep.mubr.f32.mxu0 0.0
    %v1343 = vand.u32 %v716, 4294901760
    %1344 = vmatmul.mubr.f32.gmra.mrb[0].mxu0 %v1343
    %v1345 = vpop.f32.mrb[0].mxu0
    %v1346 = vadd.f32 %v1252, %v1345
    %v1347 = vpop.f32.mrb[0].mxu0
    %1348 = vdwg.mxu0
    %1350 = vset.pattern.permute.xlu0 0
    %1351 = vperm.xlu0 %1350, %v83
    %v1352 = vpop.permute.xlu0 %1351
    %1355 = vset.pattern.permute.xlu0 0
    %1356 = vperm.xlu0 %1355, %v84
    %v1357 = vpop.permute.xlu0 %1356
    %1360 = vset.pattern.permute.xlu0 0
    %1361 = vperm.xlu0 %1360, %v85
    %v1362 = vpop.permute.xlu0 %1361
    %1365 = vset.pattern.permute.xlu0 0
    %1366 = vperm.xlu0 %1365, %v86
    %v1367 = vpop.permute.xlu0 %1366
    %v1369 = vadd.f32 %v1328, %v1352
    %v1370 = vadd.f32 %v1334, %v1357
    %v1371 = vadd.f32 %v1340, %v1362
    %v1372 = vadd.f32 %v1346, %v1367
    %v1373 = vmax.f32 %v1369, 0.0
    %v1374 = vmax.f32 %v1370, 0.0
    %v1375 = vmax.f32 %v1371, 0.0
    %v1376 = vmax.f32 %v1372, 0.0
    %v1377 = vld [vmem:[%s3] sm:$0xf]
    %v1378 = vld [vmem:[%s3 + $0x4] sm:$0xf]
    %v1379 = vld [vmem:[%s3 + $0x8] sm:$0xf]
    %v1380 = vld [vmem:[%s3 + $0xc] sm:$0xf]
    %v1381 = vpack.c.bf16 %v1374, %v1373
    %v1382 = vpack.c.bf16 %v1376, %v1375
    %1384 = vset.pattern.permute.xlu0 0
    %1385 = vperm.xlu0 %1384, %v87
    %v1386 = vpop.permute.xlu0 %1385
    %1389 = vset.pattern.permute.xlu0 0
    %1390 = vperm.xlu0 %1389, %v88
    %v1391 = vpop.permute.xlu0 %1390
    %1394 = vset.pattern.permute.xlu0 0
    %1395 = vperm.xlu0 %1394, %v89
    %v1396 = vpop.permute.xlu0 %1395
    %1399 = vset.pattern.permute.xlu0 0
    %1400 = vperm.xlu0 %1399, %v90
    %v1401 = vpop.permute.xlu0 %1400
    %v1407 = vunpack.c.l.b16 %v1377
    %v1408 = vunpack.c.l.b16 %v1378
    %v1409 = vunpack.c.l.b16 %v1379
    %v1410 = vunpack.c.l.b16 %v1380
    %v1411 = vpack.c.b16 %v1408, %v1407
    %v1412 = vpack.c.b16 %v1410, %v1409
    %vm1413 = vcmask 261120
    %v1415 = vsel %vm1413, %v1411, 0
    %v1418 = vsel %vm1413, %v1412, 0
    %1420 = vmatprep.subr.bf16.mxu0 0
    %1421 = vmatpush1.bf16.msra.mxu0 %v1381
    %1422 = vmatprep.subr.bf16.mxu0 0
    %1423 = vmatpush1.bf16.msra.mxu0 %v1382
    %1424 = vmatprep.subr.bf16.mxu0 0
    %1425 = vmatpush1.bf16.msra.mxu0 0
    %1426 = vmatprep.subr.bf16.mxu0 0
    %1427 = vmatpush1.bf16.msra.mxu0 0
    %1428 = vmatprep.subr.bf16.mxu0 0
    %1429 = vmatpush1.bf16.msra.mxu0 0
    %1430 = vmatprep.subr.bf16.mxu0 0
    %1431 = vmatpush1.bf16.msra.mxu0 0
    %1432 = vmatprep.subr.bf16.mxu0 0
    %1433 = vmatpush1.bf16.msra.mxu0 0
    %1434 = vmatprep.subr.bf16.mxu0 0
    %1435 = vmatpush1.bf16.msra.mxu0 0
    %1436 = vmatprep.subr.bf16.mxu0 0
    %1437 = vmatpush1.bf16.msra.mxu0 0
    %1438 = vmatprep.subr.bf16.mxu0 0
    %1439 = vmatpush1.bf16.msra.mxu0 0
    %1440 = vmatprep.subr.bf16.mxu0 0
    %1441 = vmatpush1.bf16.msra.mxu0 0
    %1442 = vmatprep.subr.bf16.mxu0 0
    %1443 = vmatpush1.bf16.msra.mxu0 0
    %1444 = vmatprep.subr.bf16.mxu0 0
    %1445 = vmatpush1.bf16.msra.mxu0 0
    %1446 = vmatprep.subr.bf16.mxu0 0
    %1447 = vmatpush1.bf16.msra.mxu0 0
    %1448 = vmatprep.subr.bf16.mxu0 0
    %1449 = vmatpush1.bf16.msra.mxu0 0
    %1450 = vmatprep.subr.bf16.mxu0 0
    %1451 = vmatpush1.bf16.msra.mxu0 0
    %1452 = vmatprep.mubr.bf16.mxu0 0
    %1453 = vmatmul.mubr.bf16.gmra.mrb[0].mxu0 %v1415
    %v1454 = vpop.f32.mrb[0].mxu0
    %v1455 = vadd.f32 %v1386, %v1454
    %v1456 = vpop.f32.mrb[0].mxu0
    %v1457 = vpop.f32.mrb[0].mxu0
    %v1458 = vadd.f32 %v1391, %v1457
    %v1459 = vpop.f32.mrb[0].mxu0
    %1460 = vmatprep.mubr.bf16.mxu0 0
    %1461 = vmatmul.mubr.bf16.gmra.mrb[0].mxu0 %v1418
    %v1462 = vpop.f32.mrb[0].mxu0
    %v1463 = vadd.f32 %v1396, %v1462
    %v1464 = vpop.f32.mrb[0].mxu0
    %v1465 = vpop.f32.mrb[0].mxu0
    %v1466 = vadd.f32 %v1401, %v1465
    %v1467 = vpop.f32.mrb[0].mxu0
    %1468 = vdwg.mxu0
    %v1469 = vmax.f32 %v1455, 0.0
    %v1470 = vmax.f32 %v1458, 0.0
    %v1471 = vmax.f32 %v1463, 0.0
    %v1472 = vmax.f32 %v1466, 0.0
    %s1473 = scalar_lea.vmem %s3, 16
    %v1474 = vld [vmem:[%s1473] sm:$0xf]
    %v1475 = vld [vmem:[%s1473 + $0x4] sm:$0xf]
    %v1476 = vld [vmem:[%s1473 + $0x8] sm:$0xf]
    %v1477 = vld [vmem:[%s1473 + $0xc] sm:$0xf]
    %v1478 = vpack.c.bf16 %v1470, %v1469
    %v1479 = vpack.c.bf16 %v1472, %v1471
    %1481 = vset.pattern.permute.xlu0 0
    %1482 = vperm.xlu0 %1481, %v91
    %v1483 = vpop.permute.xlu0 %1482
    %1486 = vset.pattern.permute.xlu0 0
    %1487 = vperm.xlu0 %1486, %v92
    %v1488 = vpop.permute.xlu0 %1487
    %1491 = vset.pattern.permute.xlu0 0
    %1492 = vperm.xlu0 %1491, %v93
    %v1493 = vpop.permute.xlu0 %1492
    %1496 = vset.pattern.permute.xlu0 0
    %1497 = vperm.xlu0 %1496, %v94
    %v1498 = vpop.permute.xlu0 %1497
    %v1504 = vunpack.c.l.b16 %v1474
    %v1505 = vunpack.c.l.b16 %v1475
    %v1506 = vunpack.c.l.b16 %v1476
    %v1507 = vunpack.c.l.b16 %v1477
    %v1508 = vpack.c.b16 %v1505, %v1504
    %v1509 = vpack.c.b16 %v1507, %v1506
    %v1511 = vsel %vm1413, %v1508, 0
    %v1514 = vsel %vm1413, %v1509, 0
    %1516 = vmatprep.subr.bf16.mxu0 0
    %1517 = vmatpush1.bf16.msra.mxu0 %v1478
    %1518 = vmatprep.subr.bf16.mxu0 0
    %1519 = vmatpush1.bf16.msra.mxu0 %v1479
    %1520 = vmatprep.subr.bf16.mxu0 0
    %1521 = vmatpush1.bf16.msra.mxu0 0
    %1522 = vmatprep.subr.bf16.mxu0 0
    %1523 = vmatpush1.bf16.msra.mxu0 0
    %1524 = vmatprep.subr.bf16.mxu0 0
    %1525 = vmatpush1.bf16.msra.mxu0 0
    %1526 = vmatprep.subr.bf16.mxu0 0
    %1527 = vmatpush1.bf16.msra.mxu0 0
    %1528 = vmatprep.subr.bf16.mxu0 0
    %1529 = vmatpush1.bf16.msra.mxu0 0
    %1530 = vmatprep.subr.bf16.mxu0 0
    %1531 = vmatpush1.bf16.msra.mxu0 0
    %1532 = vmatprep.subr.bf16.mxu0 0
    %1533 = vmatpush1.bf16.msra.mxu0 0
    %1534 = vmatprep.subr.bf16.mxu0 0
    %1535 = vmatpush1.bf16.msra.mxu0 0
    %1536 = vmatprep.subr.bf16.mxu0 0
    %1537 = vmatpush1.bf16.msra.mxu0 0
    %1538 = vmatprep.subr.bf16.mxu0 0
    %1539 = vmatpush1.bf16.msra.mxu0 0
    %1540 = vmatprep.subr.bf16.mxu0 0
    %1541 = vmatpush1.bf16.msra.mxu0 0
    %1542 = vmatprep.subr.bf16.mxu0 0
    %1543 = vmatpush1.bf16.msra.mxu0 0
    %1544 = vmatprep.subr.bf16.mxu0 0
    %1545 = vmatpush1.bf16.msra.mxu0 0
    %1546 = vmatprep.subr.bf16.mxu0 0
    %1547 = vmatpush1.bf16.msra.mxu0 0
    %1548 = vmatprep.mubr.bf16.mxu0 0
    %1549 = vmatmul.mubr.bf16.gmra.mrb[0].mxu0 %v1511
    %v1550 = vpop.f32.mrb[0].mxu0
    %v1551 = vadd.f32 %v1483, %v1550
    %v1552 = vpop.f32.mrb[0].mxu0
    %v1553 = vpop.f32.mrb[0].mxu0
    %v1554 = vadd.f32 %v1488, %v1553
    %v1555 = vpop.f32.mrb[0].mxu0
    %1556 = vmatprep.mubr.bf16.mxu0 0
    %1557 = vmatmul.mubr.bf16.gmra.mrb[0].mxu0 %v1514
    %v1558 = vpop.f32.mrb[0].mxu0
    %v1559 = vadd.f32 %v1493, %v1558
    %v1560 = vpop.f32.mrb[0].mxu0
    %v1561 = vpop.f32.mrb[0].mxu0
    %v1562 = vadd.f32 %v1498, %v1561
    %v1563 = vpop.f32.mrb[0].mxu0
    %1564 = vdwg.mxu0
    %v1565 = vmax.f32 %v1551, 0.0
    %v1566 = vmax.f32 %v1554, 0.0
    %v1567 = vmax.f32 %v1559, 0.0
    %v1568 = vmax.f32 %v1562, 0.0
    %s1569 = scalar_lea.vmem %s3, 32
    %v1570 = vld [vmem:[%s1569] sm:$0xf]
    %v1571 = vld [vmem:[%s1569 + $0x4] sm:$0xf]
    %v1572 = vld [vmem:[%s1569 + $0x8] sm:$0xf]
    %v1573 = vld [vmem:[%s1569 + $0xc] sm:$0xf]
    %v1574 = vpack.c.bf16 %v1566, %v1565
    %v1575 = vpack.c.bf16 %v1568, %v1567
    %1577 = vset.pattern.permute.xlu0 0
    %1578 = vperm.xlu0 %1577, %v95
    %v1579 = vpop.permute.xlu0 %1578
    %1582 = vset.pattern.permute.xlu0 0
    %1583 = vperm.xlu0 %1582, %v96
    %v1584 = vpop.permute.xlu0 %1583
    %1587 = vset.pattern.permute.xlu0 0
    %1588 = vperm.xlu0 %1587, %v97
    %v1589 = vpop.permute.xlu0 %1588
    %1592 = vset.pattern.permute.xlu0 0
    %1593 = vperm.xlu0 %1592, %v98
    %v1594 = vpop.permute.xlu0 %1593
    %v1600 = vunpack.c.l.b16 %v1570
    %v1601 = vunpack.c.l.b16 %v1571
    %v1602 = vunpack.c.l.b16 %v1572
    %v1603 = vunpack.c.l.b16 %v1573
    %v1604 = vpack.c.b16 %v1601, %v1600
    %v1605 = vpack.c.b16 %v1603, %v1602
    %v1607 = vsel %vm1413, %v1604, 0
    %v1610 = vsel %vm1413, %v1605, 0
    %1612 = vmatprep.subr.bf16.mxu0 0
    %1613 = vmatpush1.bf16.msra.mxu0 %v1574
    %1614 = vmatprep.subr.bf16.mxu0 0
    %1615 = vmatpush1.bf16.msra.mxu0 %v1575
    %1616 = vmatprep.subr.bf16.mxu0 0
    %1617 = vmatpush1.bf16.msra.mxu0 0
    %1618 = vmatprep.subr.bf16.mxu0 0
    %1619 = vmatpush1.bf16.msra.mxu0 0
    %1620 = vmatprep.subr.bf16.mxu0 0
    %1621 = vmatpush1.bf16.msra.mxu0 0
    %1622 = vmatprep.subr.bf16.mxu0 0
    %1623 = vmatpush1.bf16.msra.mxu0 0
    %1624 = vmatprep.subr.bf16.mxu0 0
    %1625 = vmatpush1.bf16.msra.mxu0 0
    %1626 = vmatprep.subr.bf16.mxu0 0
    %1627 = vmatpush1.bf16.msra.mxu0 0
    %1628 = vmatprep.subr.bf16.mxu0 0
    %1629 = vmatpush1.bf16.msra.mxu0 0
    %1630 = vmatprep.subr.bf16.mxu0 0
    %1631 = vmatpush1.bf16.msra.mxu0 0
    %1632 = vmatprep.subr.bf16.mxu0 0
    %1633 = vmatpush1.bf16.msra.mxu0 0
    %1634 = vmatprep.subr.bf16.mxu0 0
    %1635 = vmatpush1.bf16.msra.mxu0 0
    %1636 = vmatprep.subr.bf16.mxu0 0
    %1637 = vmatpush1.bf16.msra.mxu0 0
    %1638 = vmatprep.subr.bf16.mxu0 0
    %1639 = vmatpush1.bf16.msra.mxu0 0
    %1640 = vmatprep.subr.bf16.mxu0 0
    %1641 = vmatpush1.bf16.msra.mxu0 0
    %1642 = vmatprep.subr.bf16.mxu0 0
    %1643 = vmatpush1.bf16.msra.mxu0 0
    %1644 = vmatprep.mubr.bf16.mxu0 0
    %1645 = vmatmul.mubr.bf16.gmra.mrb[0].mxu0 %v1607
    %v1646 = vpop.f32.mrb[0].mxu0
    %v1647 = vadd.f32 %v1579, %v1646
    %v1648 = vpop.f32.mrb[0].mxu0
    %v1649 = vpop.f32.mrb[0].mxu0
    %v1650 = vadd.f32 %v1584, %v1649
    %v1651 = vpop.f32.mrb[0].mxu0
    %1652 = vmatprep.mubr.bf16.mxu0 0
    %1653 = vmatmul.mubr.bf16.gmra.mrb[0].mxu0 %v1610
    %v1654 = vpop.f32.mrb[0].mxu0
    %v1655 = vadd.f32 %v1589, %v1654
    %v1656 = vpop.f32.mrb[0].mxu0
    %v1657 = vpop.f32.mrb[0].mxu0
    %v1658 = vadd.f32 %v1594, %v1657
    %v1659 = vpop.f32.mrb[0].mxu0
    %1660 = vdwg.mxu0
    %v1661 = vmax.f32 %v1647, 0.0
    %v1662 = vmax.f32 %v1650, 0.0
    %v1663 = vmax.f32 %v1655, 0.0
    %v1664 = vmax.f32 %v1658, 0.0
    %v1665 = vld [vmem:[%s4] sm:$0x3]
    %v1666 = vpack.c.bf16 %v1662, %v1661
    %v1667 = vpack.c.bf16 %v1664, %v1663
    %1669 = vset.pattern.permute.xlu0 0
    %1670 = vperm.xlu0 %1669, %v99
    %v1671 = vpop.permute.xlu0 %1670
    %v1674 = vsel %vm1413, %v1665, 0
    %1676 = vmatprep.subr.bf16.mxu0 0
    %1677 = vmatpush1.bf16.msra.mxu0 %v1666
    %1678 = vmatprep.subr.bf16.mxu0 0
    %1679 = vmatpush1.bf16.msra.mxu0 %v1667
    %1680 = vmatprep.subr.bf16.mxu0 0
    %1681 = vmatpush1.bf16.msra.mxu0 0
    %1682 = vmatprep.subr.bf16.mxu0 0
    %1683 = vmatpush1.bf16.msra.mxu0 0
    %1684 = vmatprep.subr.bf16.mxu0 0
    %1685 = vmatpush1.bf16.msra.mxu0 0
    %1686 = vmatprep.subr.bf16.mxu0 0
    %1687 = vmatpush1.bf16.msra.mxu0 0
    %1688 = vmatprep.subr.bf16.mxu0 0
    %1689 = vmatpush1.bf16.msra.mxu0 0
    %1690 = vmatprep.subr.bf16.mxu0 0
    %1691 = vmatpush1.bf16.msra.mxu0 0
    %1692 = vmatprep.subr.bf16.mxu0 0
    %1693 = vmatpush1.bf16.msra.mxu0 0
    %1694 = vmatprep.subr.bf16.mxu0 0
    %1695 = vmatpush1.bf16.msra.mxu0 0
    %1696 = vmatprep.subr.bf16.mxu0 0
    %1697 = vmatpush1.bf16.msra.mxu0 0
    %1698 = vmatprep.subr.bf16.mxu0 0
    %1699 = vmatpush1.bf16.msra.mxu0 0
    %1700 = vmatprep.subr.bf16.mxu0 0
    %1701 = vmatpush1.bf16.msra.mxu0 0
    %1702 = vmatprep.subr.bf16.mxu0 0
    %1703 = vmatpush1.bf16.msra.mxu0 0
    %1704 = vmatprep.subr.bf16.mxu0 0
    %1705 = vmatpush1.bf16.msra.mxu0 0
    %1706 = vmatprep.subr.bf16.mxu0 0
    %1707 = vmatpush1.bf16.msra.mxu0 0
    %1708 = vmatprep.mubr.bf16.mxu0 0
    %1709 = vmatmul.mubr.bf16.gmra.mrb[0].mxu0 %v1674
    %v1710 = vpop.f32.mrb[0].mxu0
    %v1711 = vadd.f32 %v1671, %v1710
    %v1712 = vpop.f32.mrb[0].mxu0
    %v1713 = vpop.f32.mrb[0].mxu0
    %v1714 = vpop.f32.mrb[0].mxu0
    %1715 = vdwg.mxu0
    %vm1716 = vcmp.ge.s32.totalorder %v28, 2
    %v1717 = vmax.f32 %v1711, -20.0
    %v1718 = vmin.f32 %v1717, 2.0
    %v1719 = vsel %vm1716, %v1718, %v1711
    %1720 = vst [vmem:[#allocation2] sm:$0xf] %v1719
    // Predicated region
    $region26: #{tpu_custom_call.1} parent=1 // pred_check
      _
    $region27: #{tpu_custom_call.1} parent=1 // pred_check_branch
      %1722 = sbr.rel (0) target = $region29
    $region28: #{tpu_custom_call.1} parent=1 // pred_region
      %s1724 = ssub.s32 64, 64
      %1725 = vsyncadd [#allocation3], %s1724
      %s1727 = sshll.u32 [#allocation2], 4
      %s1728 = int_to_ptr.vmem [resolvable:$true] %s1727
      %1730 = dma.vmem_to_hbm [thread:$0]  %s1728, 64, %s6, [#allocation3]
    $region29: #{tpu_custom_call.1} parent=1 // pred_fallthru
      _
    // Predicated region
    $region30: #{tpu_custom_call.1} parent=1 // pred_check
      _
    $region31: #{tpu_custom_call.1} parent=1 // pred_check_branch
      %1732 = sbr.rel (0) target = $region33
    $region32: #{tpu_custom_call.1} parent=1 // pred_region
      %1733 = dma.done [#allocation3], 64
    $region33: #{tpu_custom_call.1} parent=1 // pred_fallthru
      _
    %1734 = vsyncpa [#allocation3], 1

</llo_original>
